<compile_context>
chip_gen: v7x
topology: tpu7x:2x2x1
jax: 0.10.0
libtpu: 0.0.40
codegen_flags: <defaults>
</compile_context>

<pallas_src>
import functools

import jax
import jax.numpy as jnp
from jax.experimental import pallas as pl
from jax.experimental.pallas import tpu as pltpu


def _svdconv_kernel(x_ref, w_ref, o_ref, *, k, stride, th, w_out):
    """One grid step == one (batch element, output row tile).

    x_ref: (Hp, Wp, in_c)        padded NHWC image (compute dtype), whole image
    w_ref: (k*k, oc_pad8, in_c)  fused per-position weights, VMEM resident
    o_ref: (oc_pad8, th*w_out)   transposed, lane-dense output tile
    """
    in_c = x_ref.shape[-1]
    rows = th * w_out
    r0 = pl.program_id(1) * (th * stride)   # first input row for this row tile

    acc = None
    for i in range(k):
        for j in range(k):
            p = i * k + j
            if stride == 1:
                win = x_ref[pl.ds(r0 + i, th), j:j + w_out, :]
            else:
                # TODO(synk): stride > 1 uses strided sublane reads (pl.ds with
                # stride); unexercised — the module default / demo path is
                # stride == 1.
                win = x_ref[pl.ds(r0 + i, th, stride),
                            pl.ds(j, w_out, stride), :]
            xm = win.reshape(rows, in_c)                       # (rows, in_c)
            # Attention-style NT matmul: (oc, in_c) x (rows, in_c) -> (oc, rows)
            part = jnp.einsum("oc,rc->or", w_ref[p], xm,
                              preferred_element_type=jnp.float32)
            acc = part if acc is None else acc + part
    # Single store of the accumulated tile (no per-position o_ref RMW).
    o_ref[...] = acc.astype(o_ref.dtype)


def _pick_row_tile(h_out, w_out, batch):
    """Pick th | h_out so the output tile is lane-dense (th*w_out % 128 == 0),
    bounded in size, and gives >= 4 parallel grid steps when possible (v7x)."""
    divisors = [d for d in range(1, h_out + 1) if h_out % d == 0]
    cands = [d for d in divisors
             if (d * w_out) % 128 == 0 and d * w_out <= 2048]
    if not cands:
        return h_out               # single spatial tile (block spans all rows)
    good = [d for d in cands if batch * (h_out // d) >= 4]
    return max(good) if good else max(cands)


@functools.partial(
    jax.jit,
    static_argnames=("k", "stride", "padding", "compute_dtype", "out_dtype"))
def svdconv_forward(x, U, V, *, k=3, stride=1, padding=0,
                    compute_dtype=jnp.bfloat16, out_dtype=jnp.float32):
    """Pallas implementation of svdconv.forward (default scheme, all positions compressed).

    x: (B, in_c, H, W) float32, NCHW
    U: (k*k, out_c, r)   per-position U factors (torch (out_c, r, 1, 1) squeezed)
    V: (k*k, r, in_c)    per-position V factors (torch (r, in_c, 1, 1) squeezed)
    returns (B, out_c, h_out, w_out) in `out_dtype`, NCHW (module's layout).
    """
    B, in_c, H, W = x.shape
    kk, out_c, r = U.shape
    assert kk == k * k and V.shape == (kk, r, in_c)

    h_out = (H + 2 * padding - (k - 1) - 1) // stride + 1
    w_out = (W + 2 * padding - (k - 1) - 1) // stride + 1
    Hp, Wp = H + 2 * padding, W + 2 * padding
    oc_pad = ((out_c + 7) // 8) * 8          # sublane-pad only (x8, not x128)

    # Input prep: NCHW -> padded NHWC in the compute dtype. transpose+pad+cast
    # fuse into one XLA pass; TODO(synk): keep activations NHWC across layers
    # to drop this pass entirely.
    x_nhwc = jnp.transpose(x, (0, 2, 3, 1))
    x_pad = jnp.pad(x_nhwc,
                    ((0, 0), (padding, padding), (padding, padding), (0, 0)))
    x_pad = x_pad.astype(compute_dtype)

    # Fuse low-rank factors per position in f32, then cast once:
    # w_fused[p, o, c] = sum_r U[p, o, r] * V[p, r, c]   -> (kk, oc_pad, in_c)
    w_fused = jnp.einsum("por,pri->poi", U, V)
    w_fused = jnp.pad(w_fused, ((0, 0), (0, oc_pad - out_c), (0, 0)))
    w_fused = w_fused.astype(compute_dtype)

    th = _pick_row_tile(h_out, w_out, B)
    nh = h_out // th
    rows_t = th * w_out

    # VMEM footprint check (double-buffered blocks + accumulator + slack) and a
    # limit sized to the chosen tiles.
    bpe = jnp.dtype(compute_dtype).itemsize
    obe = jnp.dtype(out_dtype).itemsize
    x_blk = Hp * Wp * in_c * bpe
    w_blk = kk * oc_pad * in_c * bpe
    o_blk = oc_pad * rows_t * obe
    need = 2 * (x_blk + w_blk + o_blk) + oc_pad * rows_t * 4 + (1 << 20)
    assert need <= (48 << 20), (
        f"svdconv tile footprint {need} B exceeds the per-TensorCore VMEM "
        f"budget; add halo'd spatial input tiling for this shape.")
    vmem_limit = int(min(max(2 * need, 32 << 20), 56 << 20))

    flops = 2 * B * h_out * w_out * kk * in_c * out_c
    bytes_accessed = (x_pad.size * bpe + w_fused.size * bpe
                      + B * oc_pad * h_out * w_out * obe)

    kernel = functools.partial(_svdconv_kernel, k=k, stride=stride,
                               th=th, w_out=w_out)

    out_t = pl.pallas_call(
        kernel,
        out_shape=jax.ShapeDtypeStruct((B, oc_pad, h_out * w_out), out_dtype),
        grid=(B, nh),
        in_specs=[
            # Whole padded image per batch element; constant over the row-tile
            # axis -> DMA'd once per batch element.
            pl.BlockSpec((None, Hp, Wp, in_c), lambda b, t: (b, 0, 0, 0)),
            # Full fused-weight tensor, constant index_map -> stays in VMEM.
            pl.BlockSpec((kk, oc_pad, in_c), lambda b, t: (0, 0, 0)),
        ],
        # Transposed (channels-on-sublane) lane-dense output row tile.
        out_specs=pl.BlockSpec((None, oc_pad, rows_t), lambda b, t: (b, 0, t)),
        compiler_params=pltpu.CompilerParams(
            dimension_semantics=("parallel", "parallel"),
            vmem_limit_bytes=vmem_limit),
        cost_estimate=pl.CostEstimate(flops=flops, transcendentals=0,
                                      bytes_accessed=bytes_accessed),
    )(x_pad, w_fused)

    # (B, oc_pad, h_out*w_out) -> NCHW: slice the channel pad (no-op when
    # out_c % 8 == 0) and a metadata-only reshape — no transpose pass.
    out = out_t[:, :out_c, :].reshape(B, out_c, h_out, w_out)
    return out


def _reference(x, U, V, *, k, stride, padding):
    """Pure-JAX f32 reference: equivalent conv with W[:, :, i, j] = U_ij @ V_ij."""
    kk, out_c, r = U.shape
    in_c = V.shape[2]
    Wf = jnp.einsum("por,pri->poi", U, V).reshape(k, k, out_c, in_c)
    Wf = jnp.transpose(Wf, (2, 3, 0, 1))  # (out_c, in_c, k, k)
    return jax.lax.conv_general_dilated(
        x, Wf, window_strides=(stride, stride),
        padding=[(padding, padding), (padding, padding)],
        dimension_numbers=("NCHW", "OIHW", "NCHW"))


if __name__ == "__main__":
    # Module-implied small shapes: in_channel=4, out_channel=8, rank=2,
    # kernel_size=3, stride=1, padding=1; input x: (2, 4, 16, 16).
    # TODO(synk): only the default-scheme all-compressed path is implemented;
    # scheme_1/scheme_2 and uncompressed positions reduce to plain convolutions
    # and are not exercised here.
    B, in_c, H, Wd = 2, 4, 16, 16
    out_c, r, k = 8, 2, 3
    stride, padding = 1, 1

    key = jax.random.PRNGKey(0)
    kx, ku, kv = jax.random.split(key, 3)
    x = jax.random.normal(kx, (B, in_c, H, Wd), dtype=jnp.float32)
    U = jax.random.normal(ku, (k * k, out_c, r), dtype=jnp.float32) * 0.1
    V = jax.random.normal(kv, (k * k, r, in_c), dtype=jnp.float32) * 0.1

    out = svdconv_forward(x, U, V, k=k, stride=stride, padding=padding)
    out = jax.block_until_ready(out)

    ref = _reference(x, U, V, k=k, stride=stride, padding=padding)
    assert out.shape == (B, out_c, H, Wd), out.shape
    # bf16 matmul inputs with f32 accumulation -> loose tolerance vs f32 conv.
    assert jnp.allclose(out, ref, atol=2e-2, rtol=2e-2), \
        float(jnp.max(jnp.abs(out - ref)))

    print("KERNEL_OK")
</pallas_src>

<mosaic_0001>
module attributes {stable_mosaic.version = 11 : i64} {
  func.func @_svdconv_kernel(%arg0: i32, %arg1: i32, %arg2: memref<1x18x18x4xbf16, #tpu.memory_space<vmem>>, %arg3: memref<9x8x4xbf16, #tpu.memory_space<vmem>>, %arg4: memref<1x8x128xf32, #tpu.memory_space<vmem>>) attributes {dimension_semantics = [#tpu.dimension_semantics<parallel>, #tpu.dimension_semantics<parallel>], iteration_bounds = array<i64: 2, 2>, scalar_prefetch = 0 : i64, scratch_operands = 0 : i64, tpu.core_type = #tpu.core_type<tc>, window_params = [{transform_indices = @transform_0, window_bounds = array<i64: 1, 18, 18, 4>}, {pipeline_mode = #tpu.pipeline_mode<synchronous>, transform_indices = @transform_1, window_bounds = array<i64: 9, 8, 4>}, {transform_indices = @transform_2, window_bounds = array<i64: 1, 8, 128>}]} {
    %c8_i32 = arith.constant 8 : i32
    %0 = arith.muli %arg1, %c8_i32 : i32
    %c0_i32 = arith.constant 0 : i32
    %1 = arith.addi %0, %c0_i32 : i32
    %c0 = arith.constant 0 : index
    %2 = arith.index_cast %1 : i32 to index
    %c0_0 = arith.constant 0 : index
    %c0_1 = arith.constant 0 : index
    %3 = vector.load %arg2[%c0, %2, %c0_0, %c0_1] : memref<1x18x18x4xbf16, #tpu.memory_space<vmem>>, vector<1x8x16x4xbf16>
    %4 = vector.shape_cast %3 : vector<1x8x16x4xbf16> to vector<8x16x4xbf16>
    %5 = vector.shape_cast %4 : vector<8x16x4xbf16> to vector<128x4xbf16>
    %c0_2 = arith.constant 0 : index
    %c0_3 = arith.constant 0 : index
    %c0_4 = arith.constant 0 : index
    %6 = vector.load %arg3[%c0_2, %c0_3, %c0_4] : memref<9x8x4xbf16, #tpu.memory_space<vmem>>, vector<1x8x4xbf16>
    %7 = vector.shape_cast %6 : vector<1x8x4xbf16> to vector<8x4xbf16>
    "tpu.trace_start"() <{level = 10 : i32, message = "oc,rc->or"}> : () -> ()
    %cst = arith.constant dense<0.000000e+00> : vector<8x128xf32>
    %8 = tpu.matmul %7, %5, %cst {dimension_numbers = #tpu.dot_dimension_numbers<[1], [1], [0], [0], [0, 0, 1, 0], [], []>} : vector<8x4xbf16>, vector<128x4xbf16>, vector<8x128xf32> -> vector<8x128xf32>
    "tpu.trace_stop"() : () -> ()
    %c0_i32_5 = arith.constant 0 : i32
    %9 = arith.addi %0, %c0_i32_5 : i32
    %c0_6 = arith.constant 0 : index
    %10 = arith.index_cast %9 : i32 to index
    %c1 = arith.constant 1 : index
    %c0_7 = arith.constant 0 : index
    %11 = vector.load %arg2[%c0_6, %10, %c1, %c0_7] : memref<1x18x18x4xbf16, #tpu.memory_space<vmem>>, vector<1x8x16x4xbf16>
    %12 = vector.shape_cast %11 : vector<1x8x16x4xbf16> to vector<8x16x4xbf16>
    %13 = vector.shape_cast %12 : vector<8x16x4xbf16> to vector<128x4xbf16>
    %c1_8 = arith.constant 1 : index
    %c0_9 = arith.constant 0 : index
    %c0_10 = arith.constant 0 : index
    %14 = vector.load %arg3[%c1_8, %c0_9, %c0_10] : memref<9x8x4xbf16, #tpu.memory_space<vmem>>, vector<1x8x4xbf16>
    %15 = vector.shape_cast %14 : vector<1x8x4xbf16> to vector<8x4xbf16>
    "tpu.trace_start"() <{level = 10 : i32, message = "oc,rc->or"}> : () -> ()
    %cst_11 = arith.constant dense<0.000000e+00> : vector<8x128xf32>
    %16 = tpu.matmul %15, %13, %cst_11 {dimension_numbers = #tpu.dot_dimension_numbers<[1], [1], [0], [0], [0, 0, 1, 0], [], []>} : vector<8x4xbf16>, vector<128x4xbf16>, vector<8x128xf32> -> vector<8x128xf32>
    "tpu.trace_stop"() : () -> ()
    %17 = arith.addf %8, %16 : vector<8x128xf32>
    %c0_i32_12 = arith.constant 0 : i32
    %18 = arith.addi %0, %c0_i32_12 : i32
    %c0_13 = arith.constant 0 : index
    %19 = arith.index_cast %18 : i32 to index
    %c2 = arith.constant 2 : index
    %c0_14 = arith.constant 0 : index
    %20 = vector.load %arg2[%c0_13, %19, %c2, %c0_14] : memref<1x18x18x4xbf16, #tpu.memory_space<vmem>>, vector<1x8x16x4xbf16>
    %21 = vector.shape_cast %20 : vector<1x8x16x4xbf16> to vector<8x16x4xbf16>
    %22 = vector.shape_cast %21 : vector<8x16x4xbf16> to vector<128x4xbf16>
    %c2_15 = arith.constant 2 : index
    %c0_16 = arith.constant 0 : index
    %c0_17 = arith.constant 0 : index
    %23 = vector.load %arg3[%c2_15, %c0_16, %c0_17] : memref<9x8x4xbf16, #tpu.memory_space<vmem>>, vector<1x8x4xbf16>
    %24 = vector.shape_cast %23 : vector<1x8x4xbf16> to vector<8x4xbf16>
    "tpu.trace_start"() <{level = 10 : i32, message = "oc,rc->or"}> : () -> ()
    %cst_18 = arith.constant dense<0.000000e+00> : vector<8x128xf32>
    %25 = tpu.matmul %24, %22, %cst_18 {dimension_numbers = #tpu.dot_dimension_numbers<[1], [1], [0], [0], [0, 0, 1, 0], [], []>} : vector<8x4xbf16>, vector<128x4xbf16>, vector<8x128xf32> -> vector<8x128xf32>
    "tpu.trace_stop"() : () -> ()
    %26 = arith.addf %17, %25 : vector<8x128xf32>
    %c1_i32 = arith.constant 1 : i32
    %27 = arith.addi %0, %c1_i32 : i32
    %c0_19 = arith.constant 0 : index
    %28 = arith.index_cast %27 : i32 to index
    %c0_20 = arith.constant 0 : index
    %c0_21 = arith.constant 0 : index
    %29 = vector.load %arg2[%c0_19, %28, %c0_20, %c0_21] : memref<1x18x18x4xbf16, #tpu.memory_space<vmem>>, vector<1x8x16x4xbf16>
    %30 = vector.shape_cast %29 : vector<1x8x16x4xbf16> to vector<8x16x4xbf16>
    %31 = vector.shape_cast %30 : vector<8x16x4xbf16> to vector<128x4xbf16>
    %c3 = arith.constant 3 : index
    %c0_22 = arith.constant 0 : index
    %c0_23 = arith.constant 0 : index
    %32 = vector.load %arg3[%c3, %c0_22, %c0_23] : memref<9x8x4xbf16, #tpu.memory_space<vmem>>, vector<1x8x4xbf16>
    %33 = vector.shape_cast %32 : vector<1x8x4xbf16> to vector<8x4xbf16>
    "tpu.trace_start"() <{level = 10 : i32, message = "oc,rc->or"}> : () -> ()
    %cst_24 = arith.constant dense<0.000000e+00> : vector<8x128xf32>
    %34 = tpu.matmul %33, %31, %cst_24 {dimension_numbers = #tpu.dot_dimension_numbers<[1], [1], [0], [0], [0, 0, 1, 0], [], []>} : vector<8x4xbf16>, vector<128x4xbf16>, vector<8x128xf32> -> vector<8x128xf32>
    "tpu.trace_stop"() : () -> ()
    %35 = arith.addf %26, %34 : vector<8x128xf32>
    %c1_i32_25 = arith.constant 1 : i32
    %36 = arith.addi %0, %c1_i32_25 : i32
    %c0_26 = arith.constant 0 : index
    %37 = arith.index_cast %36 : i32 to index
    %c1_27 = arith.constant 1 : index
    %c0_28 = arith.constant 0 : index
    %38 = vector.load %arg2[%c0_26, %37, %c1_27, %c0_28] : memref<1x18x18x4xbf16, #tpu.memory_space<vmem>>, vector<1x8x16x4xbf16>
    %39 = vector.shape_cast %38 : vector<1x8x16x4xbf16> to vector<8x16x4xbf16>
    %40 = vector.shape_cast %39 : vector<8x16x4xbf16> to vector<128x4xbf16>
    %c4 = arith.constant 4 : index
    %c0_29 = arith.constant 0 : index
    %c0_30 = arith.constant 0 : index
    %41 = vector.load %arg3[%c4, %c0_29, %c0_30] : memref<9x8x4xbf16, #tpu.memory_space<vmem>>, vector<1x8x4xbf16>
    %42 = vector.shape_cast %41 : vector<1x8x4xbf16> to vector<8x4xbf16>
    "tpu.trace_start"() <{level = 10 : i32, message = "oc,rc->or"}> : () -> ()
    %cst_31 = arith.constant dense<0.000000e+00> : vector<8x128xf32>
    %43 = tpu.matmul %42, %40, %cst_31 {dimension_numbers = #tpu.dot_dimension_numbers<[1], [1], [0], [0], [0, 0, 1, 0], [], []>} : vector<8x4xbf16>, vector<128x4xbf16>, vector<8x128xf32> -> vector<8x128xf32>
    "tpu.trace_stop"() : () -> ()
    %44 = arith.addf %35, %43 : vector<8x128xf32>
    %c1_i32_32 = arith.constant 1 : i32
    %45 = arith.addi %0, %c1_i32_32 : i32
    %c0_33 = arith.constant 0 : index
    %46 = arith.index_cast %45 : i32 to index
    %c2_34 = arith.constant 2 : index
    %c0_35 = arith.constant 0 : index
    %47 = vector.load %arg2[%c0_33, %46, %c2_34, %c0_35] : memref<1x18x18x4xbf16, #tpu.memory_space<vmem>>, vector<1x8x16x4xbf16>
    %48 = vector.shape_cast %47 : vector<1x8x16x4xbf16> to vector<8x16x4xbf16>
    %49 = vector.shape_cast %48 : vector<8x16x4xbf16> to vector<128x4xbf16>
    %c5 = arith.constant 5 : index
    %c0_36 = arith.constant 0 : index
    %c0_37 = arith.constant 0 : index
    %50 = vector.load %arg3[%c5, %c0_36, %c0_37] : memref<9x8x4xbf16, #tpu.memory_space<vmem>>, vector<1x8x4xbf16>
    %51 = vector.shape_cast %50 : vector<1x8x4xbf16> to vector<8x4xbf16>
    "tpu.trace_start"() <{level = 10 : i32, message = "oc,rc->or"}> : () -> ()
    %cst_38 = arith.constant dense<0.000000e+00> : vector<8x128xf32>
    %52 = tpu.matmul %51, %49, %cst_38 {dimension_numbers = #tpu.dot_dimension_numbers<[1], [1], [0], [0], [0, 0, 1, 0], [], []>} : vector<8x4xbf16>, vector<128x4xbf16>, vector<8x128xf32> -> vector<8x128xf32>
    "tpu.trace_stop"() : () -> ()
    %53 = arith.addf %44, %52 : vector<8x128xf32>
    %c2_i32 = arith.constant 2 : i32
    %54 = arith.addi %0, %c2_i32 : i32
    %c0_39 = arith.constant 0 : index
    %55 = arith.index_cast %54 : i32 to index
    %c0_40 = arith.constant 0 : index
    %c0_41 = arith.constant 0 : index
    %56 = vector.load %arg2[%c0_39, %55, %c0_40, %c0_41] : memref<1x18x18x4xbf16, #tpu.memory_space<vmem>>, vector<1x8x16x4xbf16>
    %57 = vector.shape_cast %56 : vector<1x8x16x4xbf16> to vector<8x16x4xbf16>
    %58 = vector.shape_cast %57 : vector<8x16x4xbf16> to vector<128x4xbf16>
    %c6 = arith.constant 6 : index
    %c0_42 = arith.constant 0 : index
    %c0_43 = arith.constant 0 : index
    %59 = vector.load %arg3[%c6, %c0_42, %c0_43] : memref<9x8x4xbf16, #tpu.memory_space<vmem>>, vector<1x8x4xbf16>
    %60 = vector.shape_cast %59 : vector<1x8x4xbf16> to vector<8x4xbf16>
    "tpu.trace_start"() <{level = 10 : i32, message = "oc,rc->or"}> : () -> ()
    %cst_44 = arith.constant dense<0.000000e+00> : vector<8x128xf32>
    %61 = tpu.matmul %60, %58, %cst_44 {dimension_numbers = #tpu.dot_dimension_numbers<[1], [1], [0], [0], [0, 0, 1, 0], [], []>} : vector<8x4xbf16>, vector<128x4xbf16>, vector<8x128xf32> -> vector<8x128xf32>
    "tpu.trace_stop"() : () -> ()
    %62 = arith.addf %53, %61 : vector<8x128xf32>
    %c2_i32_45 = arith.constant 2 : i32
    %63 = arith.addi %0, %c2_i32_45 : i32
    %c0_46 = arith.constant 0 : index
    %64 = arith.index_cast %63 : i32 to index
    %c1_47 = arith.constant 1 : index
    %c0_48 = arith.constant 0 : index
    %65 = vector.load %arg2[%c0_46, %64, %c1_47, %c0_48] : memref<1x18x18x4xbf16, #tpu.memory_space<vmem>>, vector<1x8x16x4xbf16>
    %66 = vector.shape_cast %65 : vector<1x8x16x4xbf16> to vector<8x16x4xbf16>
    %67 = vector.shape_cast %66 : vector<8x16x4xbf16> to vector<128x4xbf16>
    %c7 = arith.constant 7 : index
    %c0_49 = arith.constant 0 : index
    %c0_50 = arith.constant 0 : index
    %68 = vector.load %arg3[%c7, %c0_49, %c0_50] : memref<9x8x4xbf16, #tpu.memory_space<vmem>>, vector<1x8x4xbf16>
    %69 = vector.shape_cast %68 : vector<1x8x4xbf16> to vector<8x4xbf16>
    "tpu.trace_start"() <{level = 10 : i32, message = "oc,rc->or"}> : () -> ()
    %cst_51 = arith.constant dense<0.000000e+00> : vector<8x128xf32>
    %70 = tpu.matmul %69, %67, %cst_51 {dimension_numbers = #tpu.dot_dimension_numbers<[1], [1], [0], [0], [0, 0, 1, 0], [], []>} : vector<8x4xbf16>, vector<128x4xbf16>, vector<8x128xf32> -> vector<8x128xf32>
    "tpu.trace_stop"() : () -> ()
    %71 = arith.addf %62, %70 : vector<8x128xf32>
    %c2_i32_52 = arith.constant 2 : i32
    %72 = arith.addi %0, %c2_i32_52 : i32
    %c0_53 = arith.constant 0 : index
    %73 = arith.index_cast %72 : i32 to index
    %c2_54 = arith.constant 2 : index
    %c0_55 = arith.constant 0 : index
    %74 = vector.load %arg2[%c0_53, %73, %c2_54, %c0_55] : memref<1x18x18x4xbf16, #tpu.memory_space<vmem>>, vector<1x8x16x4xbf16>
    %75 = vector.shape_cast %74 : vector<1x8x16x4xbf16> to vector<8x16x4xbf16>
    %76 = vector.shape_cast %75 : vector<8x16x4xbf16> to vector<128x4xbf16>
    %c8 = arith.constant 8 : index
    %c0_56 = arith.constant 0 : index
    %c0_57 = arith.constant 0 : index
    %77 = vector.load %arg3[%c8, %c0_56, %c0_57] : memref<9x8x4xbf16, #tpu.memory_space<vmem>>, vector<1x8x4xbf16>
    %78 = vector.shape_cast %77 : vector<1x8x4xbf16> to vector<8x4xbf16>
    "tpu.trace_start"() <{level = 10 : i32, message = "oc,rc->or"}> : () -> ()
    %cst_58 = arith.constant dense<0.000000e+00> : vector<8x128xf32>
    %79 = tpu.matmul %78, %76, %cst_58 {dimension_numbers = #tpu.dot_dimension_numbers<[1], [1], [0], [0], [0, 0, 1, 0], [], []>} : vector<8x4xbf16>, vector<128x4xbf16>, vector<8x128xf32> -> vector<8x128xf32>
    "tpu.trace_stop"() : () -> ()
    %80 = arith.addf %71, %79 : vector<8x128xf32>
    %c0_59 = arith.constant 0 : index
    %c0_60 = arith.constant 0 : index
    %c0_61 = arith.constant 0 : index
    %81 = vector.load %arg4[%c0_59, %c0_60, %c0_61] : memref<1x8x128xf32, #tpu.memory_space<vmem>>, vector<1x8x128xf32>
    %82 = vector.shape_cast %81 : vector<1x8x128xf32> to vector<8x128xf32>
    %83 = vector.shape_cast %80 : vector<8x128xf32> to vector<1x8x128xf32>
    tpu.vector_store %arg4[%c0_59, %c0_60, %c0_61], %83 {strides = array<i32>} : memref<1x8x128xf32, #tpu.memory_space<vmem>>, vector<1x8x128xf32>,
    return
  }
  func.func @transform_0(%arg0: i32, %arg1: i32) -> (i32, i32, i32, i32) {
    %c0_i32 = arith.constant 0 : i32
    %c0_i32_0 = arith.constant 0 : i32
    %c0_i32_1 = arith.constant 0 : i32
    %c0_i32_2 = arith.constant 0 : i32
    return %arg0, %c0_i32, %c0_i32_0, %c0_i32_1 : i32, i32, i32, i32
  }
  func.func @transform_1(%arg0: i32, %arg1: i32) -> (i32, i32, i32) {
    %c0_i32 = arith.constant 0 : i32
    %c0_i32_0 = arith.constant 0 : i32
    %c0_i32_1 = arith.constant 0 : i32
    %c0_i32_2 = arith.constant 0 : i32
    return %c0_i32, %c0_i32_0, %c0_i32_1 : i32, i32, i32
  }
  func.func @transform_2(%arg0: i32, %arg1: i32) -> (i32, i32, i32) {
    %c0_i32 = arith.constant 0 : i32
    %c0_i32_0 = arith.constant 0 : i32
    return %arg0, %c0_i32, %arg1 : i32, i32, i32
  }
}

</mosaic_0001>

<llo_original>
// kernel: svdconv_forward.1
$region0: #{svdconv_forward.1}
  #allocation0 [shape = 'u32[]', space=smem, size = 0x4, offset = 0x4, fixed_abs, tag = 'smem constant byte address 0x4 - core index']
  #allocation1 [shape = 'u32[144,128]{1,0:T(1,128)}', space=vmem, size = 0x12000, scoped, tag = 'internal scratch']
  %s0 = inlined_call_operand.vmem [shape: bf16[2,18,18,4], index: 0, kind: input, shape index: {}]
  %s1 = inlined_call_operand.vmem [shape: bf16[9,8,4], index: 1, kind: input, shape index: {}]
  %s2 = inlined_call_operand.vmem [shape: f32[2,8,256], index: 2, kind: output, shape index: {}]
  %s3 = sld [smem:[#allocation0]]
  $region41: #{svdconv_forward.1} parent=0
    _
  %s5 = ssub.s32 1, %s3
  %s6 = scalar_select 0, %s5, %s3
  loop: start=0, step=1, limit=6
  $region2: #{svdconv_forward.1} parent=0 // loop_pre_header
    _
  $region3: #{svdconv_forward.1} parent=0 // loop_header
    %s8 = sphi 0, %s12
    %p9 = scmp.ge.s32.totalorder %s8, 6
    %s15 = sphi 0, %s27
    %s16 = sphi 0, %s23
    %s17 = sphi 0, %s15
    %s18 = sphi 0, %s16
    %s19 = sphi 0, %s17
    %s20 = sphi 0, %s18
    %s30 = sphi 0, %s32
    %s33 = sphi 0, %s30
    %s34 = sphi 0, %s33
    %s50 = sphi 0, %s34
    %s54 = sphi 0, %s54
    %s56 = sphi 0, %s54
    %s57 = sphi 0, %s56
    %s71 = sphi 0, %s57
    %s79 = sphi 0, %s81
    %s82 = sphi 0, %s79
    %s83 = sphi 0, %s82
    %s99 = sphi 0, %s83
  $region4: #{svdconv_forward.1} parent=0 // loop_header_branch
    %11 = sbr.rel (%p9) target = $region8
  $region5: #{svdconv_forward.1} parent=0 // loop_body
    %s13 = ssub.s32 %s8, 1
    %s14 = ssub.s32 %s8, 2
    %s21 = sadd.s32 1, %s16
    %p22 = scmp.ge.s32.totalorder %s21, 2
    %s23 = scalar_select %p22, 0, %s21
    %s24 = sadd.s32 1, %s15
    %s25 = scalar_select %p22, %s24, %s15
    %p26 = scmp.ge.s32.totalorder %s25, 2
    %s27 = scalar_select %p26, 0, %s25
    %s28 = ssub.s32 %s15, %s27
    %p29 = scmp.eq.s32.totalorder %s28, 0
    %s31 = sadd.s32 %s30, 1
    %s32 = scalar_select %p29, %s30, %s31
    %p35 = pneg %p29
    %p36 = scmp.eq.s32.totalorder %s8, 3
    %p37 = por %p35, %p36
    %p38 = scmp.ne.s32.totalorder %s30, %s33
    %p39 = scmp.eq.s32.totalorder %s8, 0
    %p40 = por %p38, %p39
    %p41 = scmp.ne.s32.totalorder %s30, %s33
    %p42 = scmp.eq.s32.totalorder %s13, 3
    %p43 = por %p41, %p42
    %p44 = scmp.ne.s32.totalorder %s33, %s34
    %p45 = scmp.eq.s32.totalorder %s13, 0
    %p46 = por %p44, %p45
    %p47 = scmp.ne.s32.totalorder %s33, %s34
    %p48 = scmp.eq.s32.totalorder %s14, 3
    %p49 = por %p47, %p48
    %p51 = scmp.ne.s32.totalorder %s34, %s50
    %p52 = scmp.eq.s32.totalorder %s14, 0
    %p53 = por %p51, %p52
    %s55 = sadd.s32 %s54, 1
    %p58 = scmp.eq.s32.totalorder %s8, 3
    %p59 = scmp.ne.s32.totalorder %s54, %s56
    %p60 = scmp.eq.s32.totalorder %s8, 0
    %p61 = por %p59, %p60
    %p62 = scmp.ne.s32.totalorder %s54, %s56
    %p63 = scmp.eq.s32.totalorder %s13, 3
    %p64 = por %p62, %p63
    %p65 = scmp.ne.s32.totalorder %s56, %s57
    %p66 = scmp.eq.s32.totalorder %s13, 0
    %p67 = por %p65, %p66
    %p68 = scmp.ne.s32.totalorder %s56, %s57
    %p69 = scmp.eq.s32.totalorder %s14, 3
    %p70 = por %p68, %p69
    %p72 = scmp.ne.s32.totalorder %s57, %s71
    %p73 = scmp.eq.s32.totalorder %s14, 0
    %p74 = por %p72, %p73
    %s75 = ssub.s32 %s15, %s27
    %s76 = ssub.s32 %s16, %s23
    %s77 = sor.u32 %s75, %s76
    %p78 = scmp.eq.s32.totalorder %s77, 0
    %s80 = sadd.s32 %s79, 1
    %s81 = scalar_select %p78, %s79, %s80
    %p84 = pneg %p78
    %p85 = scmp.eq.s32.totalorder %s8, 3
    %p86 = por %p84, %p85
    %p87 = scmp.ne.s32.totalorder %s79, %s82
    %p88 = scmp.eq.s32.totalorder %s8, 0
    %p89 = por %p87, %p88
    %p90 = scmp.ne.s32.totalorder %s79, %s82
    %p91 = scmp.eq.s32.totalorder %s13, 3
    %p92 = por %p90, %p91
    %p93 = scmp.ne.s32.totalorder %s82, %s83
    %p94 = scmp.eq.s32.totalorder %s13, 0
    %p95 = por %p93, %p94
    %p96 = scmp.ne.s32.totalorder %s82, %s83
    %p97 = scmp.eq.s32.totalorder %s14, 3
    %p98 = por %p96, %p97
    %p100 = scmp.ne.s32.totalorder %s83, %s99
    %p101 = scmp.eq.s32.totalorder %s14, 0
    %p102 = por %p100, %p101
    %p103 = scmp.le.s32.totalorder 1, %s8
    %p104 = scmp.lt.s32.totalorder %s8, 5
    %p105 = pnand %p103, %p104
    %p106 = pneg %p105
    // Predicated region
    $region9: #{svdconv_forward.1} parent=5 // pred_check
      _
    $region10: #{svdconv_forward.1} parent=5 // pred_check_branch
      %108 = sbr.rel (%p105) target = $region12
    $region11: #{svdconv_forward.1} parent=5 // pred_region
      %s109 = ssub.s32 %s8, 1
      // Predicated region
      $region13: #{svdconv_forward.1} parent=11 // pred_check
        %p110 = pneg %p67
      $region14: #{svdconv_forward.1} parent=11 // pred_check_branch
        %112 = sbr.rel (%p110) target = $region16
      $region15: #{svdconv_forward.1} parent=11 // pred_region
        _
      $region16: #{svdconv_forward.1} parent=11 // pred_fallthru
        _
    $region12: #{svdconv_forward.1} parent=5 // pred_fallthru
      _
    %p113 = scmp.lt.s32.totalorder %s8, 4
    // Predicated region
    $region17: #{svdconv_forward.1} parent=5 // pred_check
      %p114 = pneg %p113
    $region18: #{svdconv_forward.1} parent=5 // pred_check_branch
      %116 = sbr.rel (%p114) target = $region20
    $region19: #{svdconv_forward.1} parent=5 // pred_region
      // Predicated region
      $region21: #{svdconv_forward.1} parent=19 // pred_check
        %p117 = pneg %p40
      $region22: #{svdconv_forward.1} parent=19 // pred_check_branch
        %119 = sbr.rel (%p117) target = $region24
      $region23: #{svdconv_forward.1} parent=19 // pred_region
        %p120 = scmp.lt.s32.totalorder %s15, 1
        %s121 = scalar_select %p120, %s15, 1
        %s122 = smul.addr %s121, 54
        %s123 = smul.addr %s122, 4
        %s124 = scalar_lea.vmem %s0, %s123
      $region24: #{svdconv_forward.1} parent=19 // pred_fallthru
        _
    $region20: #{svdconv_forward.1} parent=5 // pred_fallthru
      _
    %p125 = scmp.le.s32.totalorder 1, %s8
    %p126 = scmp.lt.s32.totalorder %s8, 5
    %p127 = pnand %p125, %p126
    %p128 = pneg %p127
    // Predicated region
    $region25: #{svdconv_forward.1} parent=5 // pred_check
      _
    $region26: #{svdconv_forward.1} parent=5 // pred_check_branch
      %130 = sbr.rel (%p127) target = $region28
    $region27: #{svdconv_forward.1} parent=5 // pred_region
      %s131 = ssub.s32 %s8, 1
      %p132 = scmp.lt.s32.totalorder %s17, 1
      %s133 = scalar_select %p132, %s17, 1
      %s134 = smul.addr %s133, 54
      %s135 = smul.addr %s134, 4
      %s136 = scalar_lea.vmem %s0, %s135
      %p137 = pneg %p46
      %p138 = pneg %p43
      %p139 = pneg %p67
      %p140 = pneg %p64
      %p141 = pneg %p95
      %p142 = pneg %p92
      %p143 = scmp.lt.s32.totalorder %s17, 1
      %s144 = scalar_select %p143, %s17, 1
      %p145 = scmp.lt.s32.totalorder %s18, 1
      %s146 = scalar_select %p145, %s18, 1
      %s147 = smul.addr %s144, 2
      %s148 = sadd.s32 %s146, %s147
      %s149 = smul.addr %s148, 8
      %s150 = scalar_lea.vmem %s2, %s149
      %p151 = scmp.lt.s32.totalorder %s17, 1
      %s152 = scalar_select %p151, %s17, 1
      %s153 = smul.addr %s152, 54
      %s154 = smul.addr %s153, 4
      %s155 = scalar_lea.vmem %s0, %s154
      %p156 = scmp.lt.s32.totalorder %s17, 1
      %s157 = scalar_select %p156, %s17, 1
      %p158 = scmp.lt.s32.totalorder %s18, 1
      %s159 = scalar_select %p158, %s18, 1
      %s160 = smul.addr %s157, 2
      %s161 = sadd.s32 %s159, %s160
      %s162 = smul.addr %s161, 8
      %s163 = scalar_lea.vmem %s2, %s162
      %s165 = smul.u32 %s18, 8
      %s166 = smul.u32 %s165, 3
      %s167 = smul.addr %s166, 4
      %s168 = scalar_lea.vmem %s155, %s167
      %v169 = vld [vmem:[%s168] sm:$0xf]
      %v170 = vld [vmem:[%s168 + $0x4] sm:$0xf]
      %v171 = vld [vmem:[%s168 + $0xc] sm:$0xf]
      %v172 = vld [vmem:[%s168 + $0x10] sm:$0xf]
      %v173 = vld [vmem:[%s168 + $0x18] sm:$0xf]
      %v174 = vld [vmem:[%s168 + $0x1c] sm:$0xf]
      %v175 = vld [vmem:[%s168 + $0x24] sm:$0xf]
      %v176 = vld [vmem:[%s168 + $0x28] sm:$0xf]
      %v177 = vld [vmem:[%s168 + $0x30] sm:$0xf]
      %v178 = vld [vmem:[%s168 + $0x34] sm:$0xf]
      %v179 = vld [vmem:[%s168 + $0x3c] sm:$0xf]
      %v180 = vld [vmem:[%s168 + $0x40] sm:$0xf]
      %v181 = vld [vmem:[%s168 + $0x48] sm:$0xf]
      %v182 = vld [vmem:[%s168 + $0x4c] sm:$0xf]
      %v183 = vld [vmem:[%s168 + $0x54] sm:$0xf]
      %v184 = vld [vmem:[%s168 + $0x58] sm:$0xf]
      %v185 = vld [vmem:[%s1] sm:$0xf]
      %v186 = vld [vmem:[%s168] sm:$0xf]
      %v187 = vld [vmem:[%s168 + $0x4] sm:$0xf]
      %v188 = vld [vmem:[%s168 + $0x8] sm:$0x1]
      %v189 = vld [vmem:[%s168 + $0xc] sm:$0xf]
      %v190 = vld [vmem:[%s168 + $0x10] sm:$0xf]
      %v191 = vld [vmem:[%s168 + $0x14] sm:$0x1]
      %v192 = vld [vmem:[%s168 + $0x18] sm:$0xf]
      %v193 = vld [vmem:[%s168 + $0x1c] sm:$0xf]
      %v194 = vld [vmem:[%s168 + $0x20] sm:$0x1]
      %v195 = vld [vmem:[%s168 + $0x24] sm:$0xf]
      %v196 = vld [vmem:[%s168 + $0x28] sm:$0xf]
      %v197 = vld [vmem:[%s168 + $0x2c] sm:$0x1]
      %v198 = vld [vmem:[%s168 + $0x30] sm:$0xf]
      %v199 = vld [vmem:[%s168 + $0x34] sm:$0xf]
      %v200 = vld [vmem:[%s168 + $0x38] sm:$0x1]
      %v201 = vld [vmem:[%s168 + $0x3c] sm:$0xf]
      %v202 = vld [vmem:[%s168 + $0x40] sm:$0xf]
      %v203 = vld [vmem:[%s168 + $0x44] sm:$0x1]
      %v204 = vld [vmem:[%s168 + $0x48] sm:$0xf]
      %v205 = vld [vmem:[%s168 + $0x4c] sm:$0xf]
      %v206 = vld [vmem:[%s168 + $0x50] sm:$0x1]
      %v207 = vld [vmem:[%s168 + $0x54] sm:$0xf]
      %v208 = vld [vmem:[%s168 + $0x58] sm:$0xf]
      %v209 = vld [vmem:[%s168 + $0x5c] sm:$0x1]
      %vm210 = vsmask.f32 3328
      %vm211 = vsmask.f32 7440
      %vm212 = vmor %vm210, %vm211
      %v214 = vshrl.u32 %v186, 16
      %v216 = vrot.slane %v214, 4
      %v217 = vshll.u32 %v186, 16
      %v219 = vrot.slane %v217, 5
      %v220 = vor.u32 %v216, %v219
      %v221 = vrot.slane %v220, 4
      %v223 = vshll.u32 %v187, 16
      %v225 = vrot.slane %v223, 5
      %v226 = vsel %vm212, %v221, %v225
      %v227 = vshrl.u32 %v187, 16
      %v229 = vrot.slane %v227, 4
      %v230 = vor.u32 %v229, %v225
      %v231 = vrot.slane %v230, 4
      %v233 = vshll.u32 %v188, 16
      %v235 = vrot.slane %v233, 5
      %v236 = vsel %vm212, %v231, %v235
      %v238 = vshrl.u32 %v189, 16
      %v240 = vrot.slane %v238, 4
      %v241 = vshll.u32 %v189, 16
      %v243 = vrot.slane %v241, 5
      %v244 = vor.u32 %v240, %v243
      %v245 = vrot.slane %v244, 4
      %v247 = vshll.u32 %v190, 16
      %v249 = vrot.slane %v247, 5
      %v250 = vsel %vm212, %v245, %v249
      %v251 = vshrl.u32 %v190, 16
      %v253 = vrot.slane %v251, 4
      %v254 = vor.u32 %v253, %v249
      %v255 = vrot.slane %v254, 4
      %v257 = vshll.u32 %v191, 16
      %v259 = vrot.slane %v257, 5
      %v260 = vsel %vm212, %v255, %v259
      %v262 = vshrl.u32 %v192, 16
      %v264 = vrot.slane %v262, 4
      %v265 = vshll.u32 %v192, 16
      %v267 = vrot.slane %v265, 5
      %v268 = vor.u32 %v264, %v267
      %v269 = vrot.slane %v268, 4
      %v271 = vshll.u32 %v193, 16
      %v273 = vrot.slane %v271, 5
      %v274 = vsel %vm212, %v269, %v273
      %v275 = vshrl.u32 %v193, 16
      %v277 = vrot.slane %v275, 4
      %v278 = vor.u32 %v277, %v273
      %v279 = vrot.slane %v278, 4
      %v281 = vshll.u32 %v194, 16
      %v283 = vrot.slane %v281, 5
      %v284 = vsel %vm212, %v279, %v283
      %v286 = vshrl.u32 %v195, 16
      %v288 = vrot.slane %v286, 4
      %v289 = vshll.u32 %v195, 16
      %v291 = vrot.slane %v289, 5
      %v292 = vor.u32 %v288, %v291
      %v293 = vrot.slane %v292, 4
      %v295 = vshll.u32 %v196, 16
      %v297 = vrot.slane %v295, 5
      %v298 = vsel %vm212, %v293, %v297
      %v299 = vshrl.u32 %v196, 16
      %v301 = vrot.slane %v299, 4
      %v302 = vor.u32 %v301, %v297
      %v303 = vrot.slane %v302, 4
      %v305 = vshll.u32 %v197, 16
      %v307 = vrot.slane %v305, 5
      %v308 = vsel %vm212, %v303, %v307
      %v310 = vshrl.u32 %v198, 16
      %v312 = vrot.slane %v310, 4
      %v313 = vshll.u32 %v198, 16
      %v315 = vrot.slane %v313, 5
      %v316 = vor.u32 %v312, %v315
      %v317 = vrot.slane %v316, 4
      %v319 = vshll.u32 %v199, 16
      %v321 = vrot.slane %v319, 5
      %v322 = vsel %vm212, %v317, %v321
      %v323 = vshrl.u32 %v199, 16
      %v325 = vrot.slane %v323, 4
      %v326 = vor.u32 %v325, %v321
      %v327 = vrot.slane %v326, 4
      %v329 = vshll.u32 %v200, 16
      %v331 = vrot.slane %v329, 5
      %v332 = vsel %vm212, %v327, %v331
      %v334 = vshrl.u32 %v201, 16
      %v336 = vrot.slane %v334, 4
      %v337 = vshll.u32 %v201, 16
      %v339 = vrot.slane %v337, 5
      %v340 = vor.u32 %v336, %v339
      %v341 = vrot.slane %v340, 4
      %v343 = vshll.u32 %v202, 16
      %v345 = vrot.slane %v343, 5
      %v346 = vsel %vm212, %v341, %v345
      %v347 = vshrl.u32 %v202, 16
      %v349 = vrot.slane %v347, 4
      %v350 = vor.u32 %v349, %v345
      %v351 = vrot.slane %v350, 4
      %v353 = vshll.u32 %v203, 16
      %v355 = vrot.slane %v353, 5
      %v356 = vsel %vm212, %v351, %v355
      %v358 = vshrl.u32 %v204, 16
      %v360 = vrot.slane %v358, 4
      %v361 = vshll.u32 %v204, 16
      %v363 = vrot.slane %v361, 5
      %v364 = vor.u32 %v360, %v363
      %v365 = vrot.slane %v364, 4
      %v367 = vshll.u32 %v205, 16
      %v369 = vrot.slane %v367, 5
      %v370 = vsel %vm212, %v365, %v369
      %v371 = vshrl.u32 %v205, 16
      %v373 = vrot.slane %v371, 4
      %v374 = vor.u32 %v373, %v369
      %v375 = vrot.slane %v374, 4
      %v377 = vshll.u32 %v206, 16
      %v379 = vrot.slane %v377, 5
      %v380 = vsel %vm212, %v375, %v379
      %v382 = vshrl.u32 %v207, 16
      %v384 = vrot.slane %v382, 4
      %v385 = vshll.u32 %v207, 16
      %v387 = vrot.slane %v385, 5
      %v388 = vor.u32 %v384, %v387
      %v389 = vrot.slane %v388, 4
      %v391 = vshll.u32 %v208, 16
      %v393 = vrot.slane %v391, 5
      %v394 = vsel %vm212, %v389, %v393
      %v395 = vshrl.u32 %v208, 16
      %v397 = vrot.slane %v395, 4
      %v398 = vor.u32 %v397, %v393
      %v399 = vrot.slane %v398, 4
      %v401 = vshll.u32 %v209, 16
      %v403 = vrot.slane %v401, 5
      %v404 = vsel %vm212, %v399, %v403
      %s405 = scalar_lea.vmem %s1, 4
      %v406 = vld [vmem:[%s405] sm:$0xf]
      %v407 = vunpack.c.l.b16 %v226
      %v408 = vunpack.c.l.b16 %v236
      %v409 = vunpack.c.l.b16 %v250
      %v410 = vunpack.c.l.b16 %v260
      %v411 = vunpack.c.l.b16 %v274
      %v412 = vunpack.c.l.b16 %v284
      %v413 = vunpack.c.l.b16 %v298
      %v414 = vunpack.c.l.b16 %v308
      %v415 = vunpack.c.l.b16 %v322
      %v416 = vunpack.c.l.b16 %v332
      %v417 = vunpack.c.l.b16 %v346
      %v418 = vunpack.c.l.b16 %v356
      %v419 = vunpack.c.l.b16 %v370
      %v420 = vunpack.c.l.b16 %v380
      %v421 = vunpack.c.l.b16 %v394
      %v422 = vunpack.c.l.b16 %v404
      %v423 = vpack.c.b16 %v408, %v407
      %v424 = vpack.c.b16 %v410, %v409
      %v425 = vpack.c.b16 %v412, %v411
      %v426 = vpack.c.b16 %v414, %v413
      %v427 = vpack.c.b16 %v416, %v415
      %v428 = vpack.c.b16 %v418, %v417
      %v429 = vpack.c.b16 %v420, %v419
      %v430 = vpack.c.b16 %v422, %v421
      %vm431 = vcmask 31744
      %v433 = vsel %vm431, %v406, 0
      %v436 = vsel %vm431, %v423, 0
      %v439 = vsel %vm431, %v424, 0
      %v442 = vsel %vm431, %v425, 0
      %v445 = vsel %vm431, %v426, 0
      %v448 = vsel %vm431, %v427, 0
      %v451 = vsel %vm431, %v428, 0
      %v454 = vsel %vm431, %v429, 0
      %v457 = vsel %vm431, %v430, 0
      %459 = vmatprep.subr.bf16.mxu0 0
      %460 = vmatpush1.bf16.xpose.msra.mxu0 %v436
      %461 = vmatprep.subr.bf16.mxu0 0
      %462 = vmatpush1.bf16.xpose.msra.mxu0 %v439
      %463 = vmatprep.subr.bf16.mxu0 0
      %464 = vmatpush1.bf16.xpose.msra.mxu0 %v442
      %465 = vmatprep.subr.bf16.mxu0 0
      %466 = vmatpush1.bf16.xpose.msra.mxu0 %v445
      %467 = vmatprep.subr.bf16.mxu0 0
      %468 = vmatpush1.bf16.xpose.msra.mxu0 %v448
      %469 = vmatprep.subr.bf16.mxu0 0
      %470 = vmatpush1.bf16.xpose.msra.mxu0 %v451
      %471 = vmatprep.subr.bf16.mxu0 0
      %472 = vmatpush1.bf16.xpose.msra.mxu0 %v454
      %473 = vmatprep.subr.bf16.mxu0 0
      %474 = vmatpush1.bf16.xpose.msra.mxu0 %v457
      %475 = vmatprep.subr.bf16.mxu0 0
      %476 = vmatpush1.bf16.xpose.msra.mxu0 0
      %477 = vmatprep.subr.bf16.mxu0 0
      %478 = vmatpush1.bf16.xpose.msra.mxu0 0
      %479 = vmatprep.subr.bf16.mxu0 0
      %480 = vmatpush1.bf16.xpose.msra.mxu0 0
      %481 = vmatprep.subr.bf16.mxu0 0
      %482 = vmatpush1.bf16.xpose.msra.mxu0 0
      %483 = vmatprep.subr.bf16.mxu0 0
      %484 = vmatpush1.bf16.xpose.msra.mxu0 0
      %485 = vmatprep.subr.bf16.mxu0 0
      %486 = vmatpush1.bf16.xpose.msra.mxu0 0
      %487 = vmatprep.subr.bf16.mxu0 0
      %488 = vmatpush1.bf16.xpose.msra.mxu0 0
      %489 = vmatprep.subr.bf16.mxu0 0
      %490 = vmatpush1.bf16.xpose.msra.mxu0 0
      %491 = vmatprep.mubr.bf16.mxu0 0
      %492 = vmatmul.mubr.bf16.gmra.mrb[0].mxu0 %v433
      %v493 = vpop.f32.mrb[0].mxu0
      %v494 = vadd.f32 0.0, %v493
      %v495 = vpop.f32.mrb[0].mxu0
      %v496 = vpop.f32.mrb[0].mxu0
      %v497 = vpop.f32.mrb[0].mxu0
      %498 = vdwg.mxu0
      %v515 = vunpack.c.l.b16 %v169
      %v516 = vunpack.c.l.b16 %v170
      %v517 = vunpack.c.l.b16 %v171
      %v518 = vunpack.c.l.b16 %v172
      %v519 = vunpack.c.l.b16 %v173
      %v520 = vunpack.c.l.b16 %v174
      %v521 = vunpack.c.l.b16 %v175
      %v522 = vunpack.c.l.b16 %v176
      %v523 = vunpack.c.l.b16 %v177
      %v524 = vunpack.c.l.b16 %v178
      %v525 = vunpack.c.l.b16 %v179
      %v526 = vunpack.c.l.b16 %v180
      %v527 = vunpack.c.l.b16 %v181
      %v528 = vunpack.c.l.b16 %v182
      %v529 = vunpack.c.l.b16 %v183
      %v530 = vunpack.c.l.b16 %v184
      %v531 = vpack.c.b16 %v516, %v515
      %v532 = vpack.c.b16 %v518, %v517
      %v533 = vpack.c.b16 %v520, %v519
      %v534 = vpack.c.b16 %v522, %v521
      %v535 = vpack.c.b16 %v524, %v523
      %v536 = vpack.c.b16 %v526, %v525
      %v537 = vpack.c.b16 %v528, %v527
      %v538 = vpack.c.b16 %v530, %v529
      %v540 = vsel %vm431, %v185, 0
      %v543 = vsel %vm431, %v531, 0
      %v546 = vsel %vm431, %v532, 0
      %v549 = vsel %vm431, %v533, 0
      %v552 = vsel %vm431, %v534, 0
      %v555 = vsel %vm431, %v535, 0
      %v558 = vsel %vm431, %v536, 0
      %v561 = vsel %vm431, %v537, 0
      %v564 = vsel %vm431, %v538, 0
      %566 = vmatprep.subr.bf16.mxu0 0
      %567 = vmatpush1.bf16.xpose.msra.mxu0 %v543
      %568 = vmatprep.subr.bf16.mxu0 0
      %569 = vmatpush1.bf16.xpose.msra.mxu0 %v546
      %570 = vmatprep.subr.bf16.mxu0 0
      %571 = vmatpush1.bf16.xpose.msra.mxu0 %v549
      %572 = vmatprep.subr.bf16.mxu0 0
      %573 = vmatpush1.bf16.xpose.msra.mxu0 %v552
      %574 = vmatprep.subr.bf16.mxu0 0
      %575 = vmatpush1.bf16.xpose.msra.mxu0 %v555
      %576 = vmatprep.subr.bf16.mxu0 0
      %577 = vmatpush1.bf16.xpose.msra.mxu0 %v558
      %578 = vmatprep.subr.bf16.mxu0 0
      %579 = vmatpush1.bf16.xpose.msra.mxu0 %v561
      %580 = vmatprep.subr.bf16.mxu0 0
      %581 = vmatpush1.bf16.xpose.msra.mxu0 %v564
      %582 = vmatprep.subr.bf16.mxu0 0
      %583 = vmatpush1.bf16.xpose.msra.mxu0 0
      %584 = vmatprep.subr.bf16.mxu0 0
      %585 = vmatpush1.bf16.xpose.msra.mxu0 0
      %586 = vmatprep.subr.bf16.mxu0 0
      %587 = vmatpush1.bf16.xpose.msra.mxu0 0
      %588 = vmatprep.subr.bf16.mxu0 0
      %589 = vmatpush1.bf16.xpose.msra.mxu0 0
      %590 = vmatprep.subr.bf16.mxu0 0
      %591 = vmatpush1.bf16.xpose.msra.mxu0 0
      %592 = vmatprep.subr.bf16.mxu0 0
      %593 = vmatpush1.bf16.xpose.msra.mxu0 0
      %594 = vmatprep.subr.bf16.mxu0 0
      %595 = vmatpush1.bf16.xpose.msra.mxu0 0
      %596 = vmatprep.subr.bf16.mxu0 0
      %597 = vmatpush1.bf16.xpose.msra.mxu0 0
      %598 = vmatprep.mubr.bf16.mxu0 0
      %599 = vmatmul.mubr.bf16.gmra.mrb[0].mxu0 %v540
      %v600 = vpop.f32.mrb[0].mxu0
      %v601 = vadd.f32 %v494, %v600
      %v602 = vpop.f32.mrb[0].mxu0
      %v603 = vpop.f32.mrb[0].mxu0
      %v604 = vpop.f32.mrb[0].mxu0
      %605 = vdwg.mxu0
      %v606 = vld [vmem:[%s168] sm:$0xe]
      %v607 = vld [vmem:[%s168 + $0x4] sm:$0xf]
      %v608 = vld [vmem:[%s168 + $0x8] sm:$0x1]
      %v609 = vld [vmem:[%s168 + $0xc] sm:$0xe]
      %v610 = vld [vmem:[%s168 + $0x10] sm:$0xf]
      %v611 = vld [vmem:[%s168 + $0x14] sm:$0x1]
      %v612 = vld [vmem:[%s168 + $0x18] sm:$0xe]
      %v613 = vld [vmem:[%s168 + $0x1c] sm:$0xf]
      %v614 = vld [vmem:[%s168 + $0x20] sm:$0x1]
      %v615 = vld [vmem:[%s168 + $0x24] sm:$0xe]
      %v616 = vld [vmem:[%s168 + $0x28] sm:$0xf]
      %v617 = vld [vmem:[%s168 + $0x2c] sm:$0x1]
      %v618 = vld [vmem:[%s168 + $0x30] sm:$0xe]
      %v619 = vld [vmem:[%s168 + $0x34] sm:$0xf]
      %v620 = vld [vmem:[%s168 + $0x38] sm:$0x1]
      %v621 = vld [vmem:[%s168 + $0x3c] sm:$0xe]
      %v622 = vld [vmem:[%s168 + $0x40] sm:$0xf]
      %v623 = vld [vmem:[%s168 + $0x44] sm:$0x1]
      %v624 = vld [vmem:[%s168 + $0x48] sm:$0xe]
      %v625 = vld [vmem:[%s168 + $0x4c] sm:$0xf]
      %v626 = vld [vmem:[%s168 + $0x50] sm:$0x1]
      %v627 = vld [vmem:[%s168 + $0x54] sm:$0xe]
      %v628 = vld [vmem:[%s168 + $0x58] sm:$0xf]
      %v629 = vld [vmem:[%s168 + $0x5c] sm:$0x1]
      %vm654 = vcmask 1042432
      %vm655 = vcmask 1046532
      %vm656 = vmor %vm654, %vm655
      %v657 = vrot.slane %v606, 5
      %v658 = vrot.slane %v657, 4
      %v659 = vrot.slane %v607, 5
      %v660 = vsel %vm656, %v658, %v659
      %v661 = vrot.slane %v659, 4
      %v662 = vrot.slane %v608, 5
      %v663 = vsel %vm656, %v661, %v662
      %v664 = vrot.slane %v609, 5
      %v665 = vrot.slane %v664, 4
      %v666 = vrot.slane %v610, 5
      %v667 = vsel %vm656, %v665, %v666
      %v668 = vrot.slane %v666, 4
      %v669 = vrot.slane %v611, 5
      %v670 = vsel %vm656, %v668, %v669
      %v671 = vrot.slane %v612, 5
      %v672 = vrot.slane %v671, 4
      %v673 = vrot.slane %v613, 5
      %v674 = vsel %vm656, %v672, %v673
      %v675 = vrot.slane %v673, 4
      %v676 = vrot.slane %v614, 5
      %v677 = vsel %vm656, %v675, %v676
      %v678 = vrot.slane %v615, 5
      %v679 = vrot.slane %v678, 4
      %v680 = vrot.slane %v616, 5
      %v681 = vsel %vm656, %v679, %v680
      %v682 = vrot.slane %v680, 4
      %v683 = vrot.slane %v617, 5
      %v684 = vsel %vm656, %v682, %v683
      %v685 = vrot.slane %v618, 5
      %v686 = vrot.slane %v685, 4
      %v687 = vrot.slane %v619, 5
      %v688 = vsel %vm656, %v686, %v687
      %v689 = vrot.slane %v687, 4
      %v690 = vrot.slane %v620, 5
      %v691 = vsel %vm656, %v689, %v690
      %v692 = vrot.slane %v621, 5
      %v693 = vrot.slane %v692, 4
      %v694 = vrot.slane %v622, 5
      %v695 = vsel %vm656, %v693, %v694
      %v696 = vrot.slane %v694, 4
      %v697 = vrot.slane %v623, 5
      %v698 = vsel %vm656, %v696, %v697
      %v699 = vrot.slane %v624, 5
      %v700 = vrot.slane %v699, 4
      %v701 = vrot.slane %v625, 5
      %v702 = vsel %vm656, %v700, %v701
      %v703 = vrot.slane %v701, 4
      %v704 = vrot.slane %v626, 5
      %v705 = vsel %vm656, %v703, %v704
      %v706 = vrot.slane %v627, 5
      %v707 = vrot.slane %v706, 4
      %v708 = vrot.slane %v628, 5
      %v709 = vsel %vm656, %v707, %v708
      %v710 = vrot.slane %v708, 4
      %v711 = vrot.slane %v629, 5
      %v712 = vsel %vm656, %v710, %v711
      %s713 = scalar_lea.vmem %s1, 8
      %v714 = vld [vmem:[%s713] sm:$0xf]
      %v715 = vunpack.c.l.b16 %v660
      %v716 = vunpack.c.l.b16 %v663
      %v717 = vunpack.c.l.b16 %v667
      %v718 = vunpack.c.l.b16 %v670
      %v719 = vunpack.c.l.b16 %v674
      %v720 = vunpack.c.l.b16 %v677
      %v721 = vunpack.c.l.b16 %v681
      %v722 = vunpack.c.l.b16 %v684
      %v723 = vunpack.c.l.b16 %v688
      %v724 = vunpack.c.l.b16 %v691
      %v725 = vunpack.c.l.b16 %v695
      %v726 = vunpack.c.l.b16 %v698
      %v727 = vunpack.c.l.b16 %v702
      %v728 = vunpack.c.l.b16 %v705
      %v729 = vunpack.c.l.b16 %v709
      %v730 = vunpack.c.l.b16 %v712
      %v731 = vpack.c.b16 %v716, %v715
      %v732 = vpack.c.b16 %v718, %v717
      %v733 = vpack.c.b16 %v720, %v719
      %v734 = vpack.c.b16 %v722, %v721
      %v735 = vpack.c.b16 %v724, %v723
      %v736 = vpack.c.b16 %v726, %v725
      %v737 = vpack.c.b16 %v728, %v727
      %v738 = vpack.c.b16 %v730, %v729
      %v740 = vsel %vm431, %v714, 0
      %v743 = vsel %vm431, %v731, 0
      %v746 = vsel %vm431, %v732, 0
      %v749 = vsel %vm431, %v733, 0
      %v752 = vsel %vm431, %v734, 0
      %v755 = vsel %vm431, %v735, 0
      %v758 = vsel %vm431, %v736, 0
      %v761 = vsel %vm431, %v737, 0
      %v764 = vsel %vm431, %v738, 0
      %766 = vmatprep.subr.bf16.mxu0 0
      %767 = vmatpush1.bf16.xpose.msra.mxu0 %v743
      %768 = vmatprep.subr.bf16.mxu0 0
      %769 = vmatpush1.bf16.xpose.msra.mxu0 %v746
      %770 = vmatprep.subr.bf16.mxu0 0
      %771 = vmatpush1.bf16.xpose.msra.mxu0 %v749
      %772 = vmatprep.subr.bf16.mxu0 0
      %773 = vmatpush1.bf16.xpose.msra.mxu0 %v752
      %774 = vmatprep.subr.bf16.mxu0 0
      %775 = vmatpush1.bf16.xpose.msra.mxu0 %v755
      %776 = vmatprep.subr.bf16.mxu0 0
      %777 = vmatpush1.bf16.xpose.msra.mxu0 %v758
      %778 = vmatprep.subr.bf16.mxu0 0
      %779 = vmatpush1.bf16.xpose.msra.mxu0 %v761
      %780 = vmatprep.subr.bf16.mxu0 0
      %781 = vmatpush1.bf16.xpose.msra.mxu0 %v764
      %782 = vmatprep.subr.bf16.mxu0 0
      %783 = vmatpush1.bf16.xpose.msra.mxu0 0
      %784 = vmatprep.subr.bf16.mxu0 0
      %785 = vmatpush1.bf16.xpose.msra.mxu0 0
      %786 = vmatprep.subr.bf16.mxu0 0
      %787 = vmatpush1.bf16.xpose.msra.mxu0 0
      %788 = vmatprep.subr.bf16.mxu0 0
      %789 = vmatpush1.bf16.xpose.msra.mxu0 0
      %790 = vmatprep.subr.bf16.mxu0 0
      %791 = vmatpush1.bf16.xpose.msra.mxu0 0
      %792 = vmatprep.subr.bf16.mxu0 0
      %793 = vmatpush1.bf16.xpose.msra.mxu0 0
      %794 = vmatprep.subr.bf16.mxu0 0
      %795 = vmatpush1.bf16.xpose.msra.mxu0 0
      %796 = vmatprep.subr.bf16.mxu0 0
      %797 = vmatpush1.bf16.xpose.msra.mxu0 0
      %798 = vmatprep.mubr.bf16.mxu0 0
      %799 = vmatmul.mubr.bf16.gmra.mrb[0].mxu0 %v740
      %v800 = vpop.f32.mrb[0].mxu0
      %v801 = vadd.f32 0.0, %v800
      %v802 = vpop.f32.mrb[0].mxu0
      %v803 = vpop.f32.mrb[0].mxu0
      %v804 = vpop.f32.mrb[0].mxu0
      %805 = vdwg.mxu0
      %v806 = vadd.f32 %v601, %v801
      %s807 = sadd.s32 %s165, 1
      %s808 = smul.u32 %s807, 3
      %s809 = smul.addr %s808, 4
      %s810 = scalar_lea.vmem %s155, %s809
      %v811 = vld [vmem:[%s810] sm:$0xf]
      %v812 = vld [vmem:[%s810 + $0x4] sm:$0xf]
      %v813 = vld [vmem:[%s810 + $0xc] sm:$0xf]
      %v814 = vld [vmem:[%s810 + $0x10] sm:$0xf]
      %v815 = vld [vmem:[%s810 + $0x18] sm:$0xf]
      %v816 = vld [vmem:[%s810 + $0x1c] sm:$0xf]
      %v817 = vld [vmem:[%s810 + $0x24] sm:$0xf]
      %v818 = vld [vmem:[%s810 + $0x28] sm:$0xf]
      %v819 = vld [vmem:[%s810 + $0x30] sm:$0xf]
      %v820 = vld [vmem:[%s810 + $0x34] sm:$0xf]
      %v821 = vld [vmem:[%s810 + $0x3c] sm:$0xf]
      %v822 = vld [vmem:[%s810 + $0x40] sm:$0xf]
      %v823 = vld [vmem:[%s810 + $0x48] sm:$0xf]
      %v824 = vld [vmem:[%s810 + $0x4c] sm:$0xf]
      %v825 = vld [vmem:[%s810 + $0x54] sm:$0xf]
      %v826 = vld [vmem:[%s810 + $0x58] sm:$0xf]
      %s827 = scalar_lea.vmem %s1, 12
      %v828 = vld [vmem:[%s827] sm:$0xf]
      %v845 = vunpack.c.l.b16 %v811
      %v846 = vunpack.c.l.b16 %v812
      %v847 = vunpack.c.l.b16 %v813
      %v848 = vunpack.c.l.b16 %v814
      %v849 = vunpack.c.l.b16 %v815
      %v850 = vunpack.c.l.b16 %v816
      %v851 = vunpack.c.l.b16 %v817
      %v852 = vunpack.c.l.b16 %v818
      %v853 = vunpack.c.l.b16 %v819
      %v854 = vunpack.c.l.b16 %v820
      %v855 = vunpack.c.l.b16 %v821
      %v856 = vunpack.c.l.b16 %v822
      %v857 = vunpack.c.l.b16 %v823
      %v858 = vunpack.c.l.b16 %v824
      %v859 = vunpack.c.l.b16 %v825
      %v860 = vunpack.c.l.b16 %v826
      %v861 = vpack.c.b16 %v846, %v845
      %v862 = vpack.c.b16 %v848, %v847
      %v863 = vpack.c.b16 %v850, %v849
      %v864 = vpack.c.b16 %v852, %v851
      %v865 = vpack.c.b16 %v854, %v853
      %v866 = vpack.c.b16 %v856, %v855
      %v867 = vpack.c.b16 %v858, %v857
      %v868 = vpack.c.b16 %v860, %v859
      %v870 = vsel %vm431, %v828, 0
      %v873 = vsel %vm431, %v861, 0
      %v876 = vsel %vm431, %v862, 0
      %v879 = vsel %vm431, %v863, 0
      %v882 = vsel %vm431, %v864, 0
      %v885 = vsel %vm431, %v865, 0
      %v888 = vsel %vm431, %v866, 0
      %v891 = vsel %vm431, %v867, 0
      %v894 = vsel %vm431, %v868, 0
      %896 = vmatprep.subr.bf16.mxu0 0
      %897 = vmatpush1.bf16.xpose.msra.mxu0 %v873
      %898 = vmatprep.subr.bf16.mxu0 0
      %899 = vmatpush1.bf16.xpose.msra.mxu0 %v876
      %900 = vmatprep.subr.bf16.mxu0 0
      %901 = vmatpush1.bf16.xpose.msra.mxu0 %v879
      %902 = vmatprep.subr.bf16.mxu0 0
      %903 = vmatpush1.bf16.xpose.msra.mxu0 %v882
      %904 = vmatprep.subr.bf16.mxu0 0
      %905 = vmatpush1.bf16.xpose.msra.mxu0 %v885
      %906 = vmatprep.subr.bf16.mxu0 0
      %907 = vmatpush1.bf16.xpose.msra.mxu0 %v888
      %908 = vmatprep.subr.bf16.mxu0 0
      %909 = vmatpush1.bf16.xpose.msra.mxu0 %v891
      %910 = vmatprep.subr.bf16.mxu0 0
      %911 = vmatpush1.bf16.xpose.msra.mxu0 %v894
      %912 = vmatprep.subr.bf16.mxu0 0
      %913 = vmatpush1.bf16.xpose.msra.mxu0 0
      %914 = vmatprep.subr.bf16.mxu0 0
      %915 = vmatpush1.bf16.xpose.msra.mxu0 0
      %916 = vmatprep.subr.bf16.mxu0 0
      %917 = vmatpush1.bf16.xpose.msra.mxu0 0
      %918 = vmatprep.subr.bf16.mxu0 0
      %919 = vmatpush1.bf16.xpose.msra.mxu0 0
      %920 = vmatprep.subr.bf16.mxu0 0
      %921 = vmatpush1.bf16.xpose.msra.mxu0 0
      %922 = vmatprep.subr.bf16.mxu0 0
      %923 = vmatpush1.bf16.xpose.msra.mxu0 0
      %924 = vmatprep.subr.bf16.mxu0 0
      %925 = vmatpush1.bf16.xpose.msra.mxu0 0
      %926 = vmatprep.subr.bf16.mxu0 0
      %927 = vmatpush1.bf16.xpose.msra.mxu0 0
      %928 = vmatprep.mubr.bf16.mxu0 0
      %929 = vmatmul.mubr.bf16.gmra.mrb[0].mxu0 %v870
      %v930 = vpop.f32.mrb[0].mxu0
      %v931 = vadd.f32 0.0, %v930
      %v932 = vpop.f32.mrb[0].mxu0
      %v933 = vpop.f32.mrb[0].mxu0
      %v934 = vpop.f32.mrb[0].mxu0
      %935 = vdwg.mxu0
      %v936 = vadd.f32 %v806, %v931
      %v937 = vld [vmem:[%s810] sm:$0xf]
      %v938 = vld [vmem:[%s810 + $0x4] sm:$0xf]
      %v939 = vld [vmem:[%s810 + $0x8] sm:$0x1]
      %v940 = vld [vmem:[%s810 + $0xc] sm:$0xf]
      %v941 = vld [vmem:[%s810 + $0x10] sm:$0xf]
      %v942 = vld [vmem:[%s810 + $0x14] sm:$0x1]
      %v943 = vld [vmem:[%s810 + $0x18] sm:$0xf]
      %v944 = vld [vmem:[%s810 + $0x1c] sm:$0xf]
      %v945 = vld [vmem:[%s810 + $0x20] sm:$0x1]
      %v946 = vld [vmem:[%s810 + $0x24] sm:$0xf]
      %v947 = vld [vmem:[%s810 + $0x28] sm:$0xf]
      %v948 = vld [vmem:[%s810 + $0x2c] sm:$0x1]
      %v949 = vld [vmem:[%s810 + $0x30] sm:$0xf]
      %v950 = vld [vmem:[%s810 + $0x34] sm:$0xf]
      %v951 = vld [vmem:[%s810 + $0x38] sm:$0x1]
      %v952 = vld [vmem:[%s810 + $0x3c] sm:$0xf]
      %v953 = vld [vmem:[%s810 + $0x40] sm:$0xf]
      %v954 = vld [vmem:[%s810 + $0x44] sm:$0x1]
      %v955 = vld [vmem:[%s810 + $0x48] sm:$0xf]
      %v956 = vld [vmem:[%s810 + $0x4c] sm:$0xf]
      %v957 = vld [vmem:[%s810 + $0x50] sm:$0x1]
      %v958 = vld [vmem:[%s810 + $0x54] sm:$0xf]
      %v959 = vld [vmem:[%s810 + $0x58] sm:$0xf]
      %v960 = vld [vmem:[%s810 + $0x5c] sm:$0x1]
      %v962 = vshrl.u32 %v937, 16
      %v964 = vrot.slane %v962, 4
      %v965 = vshll.u32 %v937, 16
      %v967 = vrot.slane %v965, 5
      %v968 = vor.u32 %v964, %v967
      %v969 = vrot.slane %v968, 4
      %v971 = vshll.u32 %v938, 16
      %v973 = vrot.slane %v971, 5
      %v974 = vsel %vm212, %v969, %v973
      %v975 = vshrl.u32 %v938, 16
      %v977 = vrot.slane %v975, 4
      %v978 = vor.u32 %v977, %v973
      %v979 = vrot.slane %v978, 4
      %v981 = vshll.u32 %v939, 16
      %v983 = vrot.slane %v981, 5
      %v984 = vsel %vm212, %v979, %v983
      %v986 = vshrl.u32 %v940, 16
      %v988 = vrot.slane %v986, 4
      %v989 = vshll.u32 %v940, 16
      %v991 = vrot.slane %v989, 5
      %v992 = vor.u32 %v988, %v991
      %v993 = vrot.slane %v992, 4
      %v995 = vshll.u32 %v941, 16
      %v997 = vrot.slane %v995, 5
      %v998 = vsel %vm212, %v993, %v997
      %v999 = vshrl.u32 %v941, 16
      %v1001 = vrot.slane %v999, 4
      %v1002 = vor.u32 %v1001, %v997
      %v1003 = vrot.slane %v1002, 4
      %v1005 = vshll.u32 %v942, 16
      %v1007 = vrot.slane %v1005, 5
      %v1008 = vsel %vm212, %v1003, %v1007
      %v1010 = vshrl.u32 %v943, 16
      %v1012 = vrot.slane %v1010, 4
      %v1013 = vshll.u32 %v943, 16
      %v1015 = vrot.slane %v1013, 5
      %v1016 = vor.u32 %v1012, %v1015
      %v1017 = vrot.slane %v1016, 4
      %v1019 = vshll.u32 %v944, 16
      %v1021 = vrot.slane %v1019, 5
      %v1022 = vsel %vm212, %v1017, %v1021
      %v1023 = vshrl.u32 %v944, 16
      %v1025 = vrot.slane %v1023, 4
      %v1026 = vor.u32 %v1025, %v1021
      %v1027 = vrot.slane %v1026, 4
      %v1029 = vshll.u32 %v945, 16
      %v1031 = vrot.slane %v1029, 5
      %v1032 = vsel %vm212, %v1027, %v1031
      %v1034 = vshrl.u32 %v946, 16
      %v1036 = vrot.slane %v1034, 4
      %v1037 = vshll.u32 %v946, 16
      %v1039 = vrot.slane %v1037, 5
      %v1040 = vor.u32 %v1036, %v1039
      %v1041 = vrot.slane %v1040, 4
      %v1043 = vshll.u32 %v947, 16
      %v1045 = vrot.slane %v1043, 5
      %v1046 = vsel %vm212, %v1041, %v1045
      %v1047 = vshrl.u32 %v947, 16
      %v1049 = vrot.slane %v1047, 4
      %v1050 = vor.u32 %v1049, %v1045
      %v1051 = vrot.slane %v1050, 4
      %v1053 = vshll.u32 %v948, 16
      %v1055 = vrot.slane %v1053, 5
      %v1056 = vsel %vm212, %v1051, %v1055
      %v1058 = vshrl.u32 %v949, 16
      %v1060 = vrot.slane %v1058, 4
      %v1061 = vshll.u32 %v949, 16
      %v1063 = vrot.slane %v1061, 5
      %v1064 = vor.u32 %v1060, %v1063
      %v1065 = vrot.slane %v1064, 4
      %v1067 = vshll.u32 %v950, 16
      %v1069 = vrot.slane %v1067, 5
      %v1070 = vsel %vm212, %v1065, %v1069
      %v1071 = vshrl.u32 %v950, 16
      %v1073 = vrot.slane %v1071, 4
      %v1074 = vor.u32 %v1073, %v1069
      %v1075 = vrot.slane %v1074, 4
      %v1077 = vshll.u32 %v951, 16
      %v1079 = vrot.slane %v1077, 5
      %v1080 = vsel %vm212, %v1075, %v1079
      %v1082 = vshrl.u32 %v952, 16
      %v1084 = vrot.slane %v1082, 4
      %v1085 = vshll.u32 %v952, 16
      %v1087 = vrot.slane %v1085, 5
      %v1088 = vor.u32 %v1084, %v1087
      %v1089 = vrot.slane %v1088, 4
      %v1091 = vshll.u32 %v953, 16
      %v1093 = vrot.slane %v1091, 5
      %v1094 = vsel %vm212, %v1089, %v1093
      %v1095 = vshrl.u32 %v953, 16
      %v1097 = vrot.slane %v1095, 4
      %v1098 = vor.u32 %v1097, %v1093
      %v1099 = vrot.slane %v1098, 4
      %v1101 = vshll.u32 %v954, 16
      %v1103 = vrot.slane %v1101, 5
      %v1104 = vsel %vm212, %v1099, %v1103
      %v1106 = vshrl.u32 %v955, 16
      %v1108 = vrot.slane %v1106, 4
      %v1109 = vshll.u32 %v955, 16
      %v1111 = vrot.slane %v1109, 5
      %v1112 = vor.u32 %v1108, %v1111
      %v1113 = vrot.slane %v1112, 4
      %v1115 = vshll.u32 %v956, 16
      %v1117 = vrot.slane %v1115, 5
      %v1118 = vsel %vm212, %v1113, %v1117
      %v1119 = vshrl.u32 %v956, 16
      %v1121 = vrot.slane %v1119, 4
      %v1122 = vor.u32 %v1121, %v1117
      %v1123 = vrot.slane %v1122, 4
      %v1125 = vshll.u32 %v957, 16
      %v1127 = vrot.slane %v1125, 5
      %v1128 = vsel %vm212, %v1123, %v1127
      %v1130 = vshrl.u32 %v958, 16
      %v1132 = vrot.slane %v1130, 4
      %v1133 = vshll.u32 %v958, 16
      %v1135 = vrot.slane %v1133, 5
      %v1136 = vor.u32 %v1132, %v1135
      %v1137 = vrot.slane %v1136, 4
      %v1139 = vshll.u32 %v959, 16
      %v1141 = vrot.slane %v1139, 5
      %v1142 = vsel %vm212, %v1137, %v1141
      %v1143 = vshrl.u32 %v959, 16
      %v1145 = vrot.slane %v1143, 4
      %v1146 = vor.u32 %v1145, %v1141
      %v1147 = vrot.slane %v1146, 4
      %v1149 = vshll.u32 %v960, 16
      %v1151 = vrot.slane %v1149, 5
      %v1152 = vsel %vm212, %v1147, %v1151
      %s1153 = scalar_lea.vmem %s1, 16
      %v1154 = vld [vmem:[%s1153] sm:$0xf]
      %v1155 = vunpack.c.l.b16 %v974
      %v1156 = vunpack.c.l.b16 %v984
      %v1157 = vunpack.c.l.b16 %v998
      %v1158 = vunpack.c.l.b16 %v1008
      %v1159 = vunpack.c.l.b16 %v1022
      %v1160 = vunpack.c.l.b16 %v1032
      %v1161 = vunpack.c.l.b16 %v1046
      %v1162 = vunpack.c.l.b16 %v1056
      %v1163 = vunpack.c.l.b16 %v1070
      %v1164 = vunpack.c.l.b16 %v1080
      %v1165 = vunpack.c.l.b16 %v1094
      %v1166 = vunpack.c.l.b16 %v1104
      %v1167 = vunpack.c.l.b16 %v1118
      %v1168 = vunpack.c.l.b16 %v1128
      %v1169 = vunpack.c.l.b16 %v1142
      %v1170 = vunpack.c.l.b16 %v1152
      %v1171 = vpack.c.b16 %v1156, %v1155
      %v1172 = vpack.c.b16 %v1158, %v1157
      %v1173 = vpack.c.b16 %v1160, %v1159
      %v1174 = vpack.c.b16 %v1162, %v1161
      %v1175 = vpack.c.b16 %v1164, %v1163
      %v1176 = vpack.c.b16 %v1166, %v1165
      %v1177 = vpack.c.b16 %v1168, %v1167
      %v1178 = vpack.c.b16 %v1170, %v1169
      %v1180 = vsel %vm431, %v1154, 0
      %v1183 = vsel %vm431, %v1171, 0
      %v1186 = vsel %vm431, %v1172, 0
      %v1189 = vsel %vm431, %v1173, 0
      %v1192 = vsel %vm431, %v1174, 0
      %v1195 = vsel %vm431, %v1175, 0
      %v1198 = vsel %vm431, %v1176, 0
      %v1201 = vsel %vm431, %v1177, 0
      %v1204 = vsel %vm431, %v1178, 0
      %1206 = vmatprep.subr.bf16.mxu0 0
      %1207 = vmatpush1.bf16.xpose.msra.mxu0 %v1183
      %1208 = vmatprep.subr.bf16.mxu0 0
      %1209 = vmatpush1.bf16.xpose.msra.mxu0 %v1186
      %1210 = vmatprep.subr.bf16.mxu0 0
      %1211 = vmatpush1.bf16.xpose.msra.mxu0 %v1189
      %1212 = vmatprep.subr.bf16.mxu0 0
      %1213 = vmatpush1.bf16.xpose.msra.mxu0 %v1192
      %1214 = vmatprep.subr.bf16.mxu0 0
      %1215 = vmatpush1.bf16.xpose.msra.mxu0 %v1195
      %1216 = vmatprep.subr.bf16.mxu0 0
      %1217 = vmatpush1.bf16.xpose.msra.mxu0 %v1198
      %1218 = vmatprep.subr.bf16.mxu0 0
      %1219 = vmatpush1.bf16.xpose.msra.mxu0 %v1201
      %1220 = vmatprep.subr.bf16.mxu0 0
      %1221 = vmatpush1.bf16.xpose.msra.mxu0 %v1204
      %1222 = vmatprep.subr.bf16.mxu0 0
      %1223 = vmatpush1.bf16.xpose.msra.mxu0 0
      %1224 = vmatprep.subr.bf16.mxu0 0
      %1225 = vmatpush1.bf16.xpose.msra.mxu0 0
      %1226 = vmatprep.subr.bf16.mxu0 0
      %1227 = vmatpush1.bf16.xpose.msra.mxu0 0
      %1228 = vmatprep.subr.bf16.mxu0 0
      %1229 = vmatpush1.bf16.xpose.msra.mxu0 0
      %1230 = vmatprep.subr.bf16.mxu0 0
      %1231 = vmatpush1.bf16.xpose.msra.mxu0 0
      %1232 = vmatprep.subr.bf16.mxu0 0
      %1233 = vmatpush1.bf16.xpose.msra.mxu0 0
      %1234 = vmatprep.subr.bf16.mxu0 0
      %1235 = vmatpush1.bf16.xpose.msra.mxu0 0
      %1236 = vmatprep.subr.bf16.mxu0 0
      %1237 = vmatpush1.bf16.xpose.msra.mxu0 0
      %1238 = vmatprep.mubr.bf16.mxu0 0
      %1239 = vmatmul.mubr.bf16.gmra.mrb[0].mxu0 %v1180
      %v1240 = vpop.f32.mrb[0].mxu0
      %v1241 = vadd.f32 0.0, %v1240
      %v1242 = vpop.f32.mrb[0].mxu0
      %v1243 = vpop.f32.mrb[0].mxu0
      %v1244 = vpop.f32.mrb[0].mxu0
      %1245 = vdwg.mxu0
      %v1246 = vadd.f32 %v936, %v1241
      %v1247 = vld [vmem:[%s810] sm:$0xe]
      %v1248 = vld [vmem:[%s810 + $0x4] sm:$0xf]
      %v1249 = vld [vmem:[%s810 + $0x8] sm:$0x1]
      %v1250 = vld [vmem:[%s810 + $0xc] sm:$0xe]
      %v1251 = vld [vmem:[%s810 + $0x10] sm:$0xf]
      %v1252 = vld [vmem:[%s810 + $0x14] sm:$0x1]
      %v1253 = vld [vmem:[%s810 + $0x18] sm:$0xe]
      %v1254 = vld [vmem:[%s810 + $0x1c] sm:$0xf]
      %v1255 = vld [vmem:[%s810 + $0x20] sm:$0x1]
      %v1256 = vld [vmem:[%s810 + $0x24] sm:$0xe]
      %v1257 = vld [vmem:[%s810 + $0x28] sm:$0xf]
      %v1258 = vld [vmem:[%s810 + $0x2c] sm:$0x1]
      %v1259 = vld [vmem:[%s810 + $0x30] sm:$0xe]
      %v1260 = vld [vmem:[%s810 + $0x34] sm:$0xf]
      %v1261 = vld [vmem:[%s810 + $0x38] sm:$0x1]
      %v1262 = vld [vmem:[%s810 + $0x3c] sm:$0xe]
      %v1263 = vld [vmem:[%s810 + $0x40] sm:$0xf]
      %v1264 = vld [vmem:[%s810 + $0x44] sm:$0x1]
      %v1265 = vld [vmem:[%s810 + $0x48] sm:$0xe]
      %v1266 = vld [vmem:[%s810 + $0x4c] sm:$0xf]
      %v1267 = vld [vmem:[%s810 + $0x50] sm:$0x1]
      %v1268 = vld [vmem:[%s810 + $0x54] sm:$0xe]
      %v1269 = vld [vmem:[%s810 + $0x58] sm:$0xf]
      %v1270 = vld [vmem:[%s810 + $0x5c] sm:$0x1]
      %v1295 = vrot.slane %v1247, 5
      %v1296 = vrot.slane %v1295, 4
      %v1297 = vrot.slane %v1248, 5
      %v1298 = vsel %vm656, %v1296, %v1297
      %v1299 = vrot.slane %v1297, 4
      %v1300 = vrot.slane %v1249, 5
      %v1301 = vsel %vm656, %v1299, %v1300
      %v1302 = vrot.slane %v1250, 5
      %v1303 = vrot.slane %v1302, 4
      %v1304 = vrot.slane %v1251, 5
      %v1305 = vsel %vm656, %v1303, %v1304
      %v1306 = vrot.slane %v1304, 4
      %v1307 = vrot.slane %v1252, 5
      %v1308 = vsel %vm656, %v1306, %v1307
      %v1309 = vrot.slane %v1253, 5
      %v1310 = vrot.slane %v1309, 4
      %v1311 = vrot.slane %v1254, 5
      %v1312 = vsel %vm656, %v1310, %v1311
      %v1313 = vrot.slane %v1311, 4
      %v1314 = vrot.slane %v1255, 5
      %v1315 = vsel %vm656, %v1313, %v1314
      %v1316 = vrot.slane %v1256, 5
      %v1317 = vrot.slane %v1316, 4
      %v1318 = vrot.slane %v1257, 5
      %v1319 = vsel %vm656, %v1317, %v1318
      %v1320 = vrot.slane %v1318, 4
      %v1321 = vrot.slane %v1258, 5
      %v1322 = vsel %vm656, %v1320, %v1321
      %v1323 = vrot.slane %v1259, 5
      %v1324 = vrot.slane %v1323, 4
      %v1325 = vrot.slane %v1260, 5
      %v1326 = vsel %vm656, %v1324, %v1325
      %v1327 = vrot.slane %v1325, 4
      %v1328 = vrot.slane %v1261, 5
      %v1329 = vsel %vm656, %v1327, %v1328
      %v1330 = vrot.slane %v1262, 5
      %v1331 = vrot.slane %v1330, 4
      %v1332 = vrot.slane %v1263, 5
      %v1333 = vsel %vm656, %v1331, %v1332
      %v1334 = vrot.slane %v1332, 4
      %v1335 = vrot.slane %v1264, 5
      %v1336 = vsel %vm656, %v1334, %v1335
      %v1337 = vrot.slane %v1265, 5
      %v1338 = vrot.slane %v1337, 4
      %v1339 = vrot.slane %v1266, 5
      %v1340 = vsel %vm656, %v1338, %v1339
      %v1341 = vrot.slane %v1339, 4
      %v1342 = vrot.slane %v1267, 5
      %v1343 = vsel %vm656, %v1341, %v1342
      %v1344 = vrot.slane %v1268, 5
      %v1345 = vrot.slane %v1344, 4
      %v1346 = vrot.slane %v1269, 5
      %v1347 = vsel %vm656, %v1345, %v1346
      %v1348 = vrot.slane %v1346, 4
      %v1349 = vrot.slane %v1270, 5
      %v1350 = vsel %vm656, %v1348, %v1349
      %s1351 = scalar_lea.vmem %s1, 20
      %v1352 = vld [vmem:[%s1351] sm:$0xf]
      %v1353 = vunpack.c.l.b16 %v1298
      %v1354 = vunpack.c.l.b16 %v1301
      %v1355 = vunpack.c.l.b16 %v1305
      %v1356 = vunpack.c.l.b16 %v1308
      %v1357 = vunpack.c.l.b16 %v1312
      %v1358 = vunpack.c.l.b16 %v1315
      %v1359 = vunpack.c.l.b16 %v1319
      %v1360 = vunpack.c.l.b16 %v1322
      %v1361 = vunpack.c.l.b16 %v1326
      %v1362 = vunpack.c.l.b16 %v1329
      %v1363 = vunpack.c.l.b16 %v1333
      %v1364 = vunpack.c.l.b16 %v1336
      %v1365 = vunpack.c.l.b16 %v1340
      %v1366 = vunpack.c.l.b16 %v1343
      %v1367 = vunpack.c.l.b16 %v1347
      %v1368 = vunpack.c.l.b16 %v1350
      %v1369 = vpack.c.b16 %v1354, %v1353
      %v1370 = vpack.c.b16 %v1356, %v1355
      %v1371 = vpack.c.b16 %v1358, %v1357
      %v1372 = vpack.c.b16 %v1360, %v1359
      %v1373 = vpack.c.b16 %v1362, %v1361
      %v1374 = vpack.c.b16 %v1364, %v1363
      %v1375 = vpack.c.b16 %v1366, %v1365
      %v1376 = vpack.c.b16 %v1368, %v1367
      %v1378 = vsel %vm431, %v1352, 0
      %v1381 = vsel %vm431, %v1369, 0
      %v1384 = vsel %vm431, %v1370, 0
      %v1387 = vsel %vm431, %v1371, 0
      %v1390 = vsel %vm431, %v1372, 0
      %v1393 = vsel %vm431, %v1373, 0
      %v1396 = vsel %vm431, %v1374, 0
      %v1399 = vsel %vm431, %v1375, 0
      %v1402 = vsel %vm431, %v1376, 0
      %1404 = vmatprep.subr.bf16.mxu0 0
      %1405 = vmatpush1.bf16.xpose.msra.mxu0 %v1381
      %1406 = vmatprep.subr.bf16.mxu0 0
      %1407 = vmatpush1.bf16.xpose.msra.mxu0 %v1384
      %1408 = vmatprep.subr.bf16.mxu0 0
      %1409 = vmatpush1.bf16.xpose.msra.mxu0 %v1387
      %1410 = vmatprep.subr.bf16.mxu0 0
      %1411 = vmatpush1.bf16.xpose.msra.mxu0 %v1390
      %1412 = vmatprep.subr.bf16.mxu0 0
      %1413 = vmatpush1.bf16.xpose.msra.mxu0 %v1393
      %1414 = vmatprep.subr.bf16.mxu0 0
      %1415 = vmatpush1.bf16.xpose.msra.mxu0 %v1396
      %1416 = vmatprep.subr.bf16.mxu0 0
      %1417 = vmatpush1.bf16.xpose.msra.mxu0 %v1399
      %1418 = vmatprep.subr.bf16.mxu0 0
      %1419 = vmatpush1.bf16.xpose.msra.mxu0 %v1402
      %1420 = vmatprep.subr.bf16.mxu0 0
      %1421 = vmatpush1.bf16.xpose.msra.mxu0 0
      %1422 = vmatprep.subr.bf16.mxu0 0
      %1423 = vmatpush1.bf16.xpose.msra.mxu0 0
      %1424 = vmatprep.subr.bf16.mxu0 0
      %1425 = vmatpush1.bf16.xpose.msra.mxu0 0
      %1426 = vmatprep.subr.bf16.mxu0 0
      %1427 = vmatpush1.bf16.xpose.msra.mxu0 0
      %1428 = vmatprep.subr.bf16.mxu0 0
      %1429 = vmatpush1.bf16.xpose.msra.mxu0 0
      %1430 = vmatprep.subr.bf16.mxu0 0
      %1431 = vmatpush1.bf16.xpose.msra.mxu0 0
      %1432 = vmatprep.subr.bf16.mxu0 0
      %1433 = vmatpush1.bf16.xpose.msra.mxu0 0
      %1434 = vmatprep.subr.bf16.mxu0 0
      %1435 = vmatpush1.bf16.xpose.msra.mxu0 0
      %1436 = vmatprep.mubr.bf16.mxu0 0
      %1437 = vmatmul.mubr.bf16.gmra.mrb[0].mxu0 %v1378
      %v1438 = vpop.f32.mrb[0].mxu0
      %v1439 = vadd.f32 0.0, %v1438
      %v1440 = vpop.f32.mrb[0].mxu0
      %v1441 = vpop.f32.mrb[0].mxu0
      %v1442 = vpop.f32.mrb[0].mxu0
      %1443 = vdwg.mxu0
      %v1444 = vadd.f32 %v1246, %v1439
      %s1445 = sadd.s32 %s165, 2
      %s1446 = smul.u32 %s1445, 3
      %s1447 = smul.addr %s1446, 4
      %s1448 = scalar_lea.vmem %s155, %s1447
      %v1449 = vld [vmem:[%s1448] sm:$0xf]
      %v1450 = vld [vmem:[%s1448 + $0x4] sm:$0xf]
      %v1451 = vld [vmem:[%s1448 + $0xc] sm:$0xf]
      %v1452 = vld [vmem:[%s1448 + $0x10] sm:$0xf]
      %v1453 = vld [vmem:[%s1448 + $0x18] sm:$0xf]
      %v1454 = vld [vmem:[%s1448 + $0x1c] sm:$0xf]
      %v1455 = vld [vmem:[%s1448 + $0x24] sm:$0xf]
      %v1456 = vld [vmem:[%s1448 + $0x28] sm:$0xf]
      %v1457 = vld [vmem:[%s1448 + $0x30] sm:$0xf]
      %v1458 = vld [vmem:[%s1448 + $0x34] sm:$0xf]
      %v1459 = vld [vmem:[%s1448 + $0x3c] sm:$0xf]
      %v1460 = vld [vmem:[%s1448 + $0x40] sm:$0xf]
      %v1461 = vld [vmem:[%s1448 + $0x48] sm:$0xf]
      %v1462 = vld [vmem:[%s1448 + $0x4c] sm:$0xf]
      %v1463 = vld [vmem:[%s1448 + $0x54] sm:$0xf]
      %v1464 = vld [vmem:[%s1448 + $0x58] sm:$0xf]
      %s1465 = scalar_lea.vmem %s1, 24
      %v1466 = vld [vmem:[%s1465] sm:$0xf]
      %v1483 = vunpack.c.l.b16 %v1449
      %v1484 = vunpack.c.l.b16 %v1450
      %v1485 = vunpack.c.l.b16 %v1451
      %v1486 = vunpack.c.l.b16 %v1452
      %v1487 = vunpack.c.l.b16 %v1453
      %v1488 = vunpack.c.l.b16 %v1454
      %v1489 = vunpack.c.l.b16 %v1455
      %v1490 = vunpack.c.l.b16 %v1456
      %v1491 = vunpack.c.l.b16 %v1457
      %v1492 = vunpack.c.l.b16 %v1458
      %v1493 = vunpack.c.l.b16 %v1459
      %v1494 = vunpack.c.l.b16 %v1460
      %v1495 = vunpack.c.l.b16 %v1461
      %v1496 = vunpack.c.l.b16 %v1462
      %v1497 = vunpack.c.l.b16 %v1463
      %v1498 = vunpack.c.l.b16 %v1464
      %v1499 = vpack.c.b16 %v1484, %v1483
      %v1500 = vpack.c.b16 %v1486, %v1485
      %v1501 = vpack.c.b16 %v1488, %v1487
      %v1502 = vpack.c.b16 %v1490, %v1489
      %v1503 = vpack.c.b16 %v1492, %v1491
      %v1504 = vpack.c.b16 %v1494, %v1493
      %v1505 = vpack.c.b16 %v1496, %v1495
      %v1506 = vpack.c.b16 %v1498, %v1497
      %v1508 = vsel %vm431, %v1466, 0
      %v1511 = vsel %vm431, %v1499, 0
      %v1514 = vsel %vm431, %v1500, 0
      %v1517 = vsel %vm431, %v1501, 0
      %v1520 = vsel %vm431, %v1502, 0
      %v1523 = vsel %vm431, %v1503, 0
      %v1526 = vsel %vm431, %v1504, 0
      %v1529 = vsel %vm431, %v1505, 0
      %v1532 = vsel %vm431, %v1506, 0
      %1534 = vmatprep.subr.bf16.mxu0 0
      %1535 = vmatpush1.bf16.xpose.msra.mxu0 %v1511
      %1536 = vmatprep.subr.bf16.mxu0 0
      %1537 = vmatpush1.bf16.xpose.msra.mxu0 %v1514
      %1538 = vmatprep.subr.bf16.mxu0 0
      %1539 = vmatpush1.bf16.xpose.msra.mxu0 %v1517
      %1540 = vmatprep.subr.bf16.mxu0 0
      %1541 = vmatpush1.bf16.xpose.msra.mxu0 %v1520
      %1542 = vmatprep.subr.bf16.mxu0 0
      %1543 = vmatpush1.bf16.xpose.msra.mxu0 %v1523
      %1544 = vmatprep.subr.bf16.mxu0 0
      %1545 = vmatpush1.bf16.xpose.msra.mxu0 %v1526
      %1546 = vmatprep.subr.bf16.mxu0 0
      %1547 = vmatpush1.bf16.xpose.msra.mxu0 %v1529
      %1548 = vmatprep.subr.bf16.mxu0 0
      %1549 = vmatpush1.bf16.xpose.msra.mxu0 %v1532
      %1550 = vmatprep.subr.bf16.mxu0 0
      %1551 = vmatpush1.bf16.xpose.msra.mxu0 0
      %1552 = vmatprep.subr.bf16.mxu0 0
      %1553 = vmatpush1.bf16.xpose.msra.mxu0 0
      %1554 = vmatprep.subr.bf16.mxu0 0
      %1555 = vmatpush1.bf16.xpose.msra.mxu0 0
      %1556 = vmatprep.subr.bf16.mxu0 0
      %1557 = vmatpush1.bf16.xpose.msra.mxu0 0
      %1558 = vmatprep.subr.bf16.mxu0 0
      %1559 = vmatpush1.bf16.xpose.msra.mxu0 0
      %1560 = vmatprep.subr.bf16.mxu0 0
      %1561 = vmatpush1.bf16.xpose.msra.mxu0 0
      %1562 = vmatprep.subr.bf16.mxu0 0
      %1563 = vmatpush1.bf16.xpose.msra.mxu0 0
      %1564 = vmatprep.subr.bf16.mxu0 0
      %1565 = vmatpush1.bf16.xpose.msra.mxu0 0
      %1566 = vmatprep.mubr.bf16.mxu0 0
      %1567 = vmatmul.mubr.bf16.gmra.mrb[0].mxu0 %v1508
      %v1568 = vpop.f32.mrb[0].mxu0
      %v1569 = vadd.f32 0.0, %v1568
      %v1570 = vpop.f32.mrb[0].mxu0
      %v1571 = vpop.f32.mrb[0].mxu0
      %v1572 = vpop.f32.mrb[0].mxu0
      %1573 = vdwg.mxu0
      %v1574 = vadd.f32 %v1444, %v1569
      %v1575 = vld [vmem:[%s1448] sm:$0xf]
      %v1576 = vld [vmem:[%s1448 + $0x4] sm:$0xf]
      %v1577 = vld [vmem:[%s1448 + $0x8] sm:$0x1]
      %v1578 = vld [vmem:[%s1448 + $0xc] sm:$0xf]
      %v1579 = vld [vmem:[%s1448 + $0x10] sm:$0xf]
      %v1580 = vld [vmem:[%s1448 + $0x14] sm:$0x1]
      %v1581 = vld [vmem:[%s1448 + $0x18] sm:$0xf]
      %v1582 = vld [vmem:[%s1448 + $0x1c] sm:$0xf]
      %v1583 = vld [vmem:[%s1448 + $0x20] sm:$0x1]
      %v1584 = vld [vmem:[%s1448 + $0x24] sm:$0xf]
      %v1585 = vld [vmem:[%s1448 + $0x28] sm:$0xf]
      %v1586 = vld [vmem:[%s1448 + $0x2c] sm:$0x1]
      %v1587 = vld [vmem:[%s1448 + $0x30] sm:$0xf]
      %v1588 = vld [vmem:[%s1448 + $0x34] sm:$0xf]
      %v1589 = vld [vmem:[%s1448 + $0x38] sm:$0x1]
      %v1590 = vld [vmem:[%s1448 + $0x3c] sm:$0xf]
      %v1591 = vld [vmem:[%s1448 + $0x40] sm:$0xf]
      %v1592 = vld [vmem:[%s1448 + $0x44] sm:$0x1]
      %v1593 = vld [vmem:[%s1448 + $0x48] sm:$0xf]
      %v1594 = vld [vmem:[%s1448 + $0x4c] sm:$0xf]
      %v1595 = vld [vmem:[%s1448 + $0x50] sm:$0x1]
      %v1596 = vld [vmem:[%s1448 + $0x54] sm:$0xf]
      %v1597 = vld [vmem:[%s1448 + $0x58] sm:$0xf]
      %v1598 = vld [vmem:[%s1448 + $0x5c] sm:$0x1]
      %v1600 = vshrl.u32 %v1575, 16
      %v1602 = vrot.slane %v1600, 4
      %v1603 = vshll.u32 %v1575, 16
      %v1605 = vrot.slane %v1603, 5
      %v1606 = vor.u32 %v1602, %v1605
      %v1607 = vrot.slane %v1606, 4
      %v1609 = vshll.u32 %v1576, 16
      %v1611 = vrot.slane %v1609, 5
      %v1612 = vsel %vm212, %v1607, %v1611
      %v1613 = vshrl.u32 %v1576, 16
      %v1615 = vrot.slane %v1613, 4
      %v1616 = vor.u32 %v1615, %v1611
      %v1617 = vrot.slane %v1616, 4
      %v1619 = vshll.u32 %v1577, 16
      %v1621 = vrot.slane %v1619, 5
      %v1622 = vsel %vm212, %v1617, %v1621
      %v1624 = vshrl.u32 %v1578, 16
      %v1626 = vrot.slane %v1624, 4
      %v1627 = vshll.u32 %v1578, 16
      %v1629 = vrot.slane %v1627, 5
      %v1630 = vor.u32 %v1626, %v1629
      %v1631 = vrot.slane %v1630, 4
      %v1633 = vshll.u32 %v1579, 16
      %v1635 = vrot.slane %v1633, 5
      %v1636 = vsel %vm212, %v1631, %v1635
      %v1637 = vshrl.u32 %v1579, 16
      %v1639 = vrot.slane %v1637, 4
      %v1640 = vor.u32 %v1639, %v1635
      %v1641 = vrot.slane %v1640, 4
      %v1643 = vshll.u32 %v1580, 16
      %v1645 = vrot.slane %v1643, 5
      %v1646 = vsel %vm212, %v1641, %v1645
      %v1648 = vshrl.u32 %v1581, 16
      %v1650 = vrot.slane %v1648, 4
      %v1651 = vshll.u32 %v1581, 16
      %v1653 = vrot.slane %v1651, 5
      %v1654 = vor.u32 %v1650, %v1653
      %v1655 = vrot.slane %v1654, 4
      %v1657 = vshll.u32 %v1582, 16
      %v1659 = vrot.slane %v1657, 5
      %v1660 = vsel %vm212, %v1655, %v1659
      %v1661 = vshrl.u32 %v1582, 16
      %v1663 = vrot.slane %v1661, 4
      %v1664 = vor.u32 %v1663, %v1659
      %v1665 = vrot.slane %v1664, 4
      %v1667 = vshll.u32 %v1583, 16
      %v1669 = vrot.slane %v1667, 5
      %v1670 = vsel %vm212, %v1665, %v1669
      %v1672 = vshrl.u32 %v1584, 16
      %v1674 = vrot.slane %v1672, 4
      %v1675 = vshll.u32 %v1584, 16
      %v1677 = vrot.slane %v1675, 5
      %v1678 = vor.u32 %v1674, %v1677
      %v1679 = vrot.slane %v1678, 4
      %v1681 = vshll.u32 %v1585, 16
      %v1683 = vrot.slane %v1681, 5
      %v1684 = vsel %vm212, %v1679, %v1683
      %v1685 = vshrl.u32 %v1585, 16
      %v1687 = vrot.slane %v1685, 4
      %v1688 = vor.u32 %v1687, %v1683
      %v1689 = vrot.slane %v1688, 4
      %v1691 = vshll.u32 %v1586, 16
      %v1693 = vrot.slane %v1691, 5
      %v1694 = vsel %vm212, %v1689, %v1693
      %v1696 = vshrl.u32 %v1587, 16
      %v1698 = vrot.slane %v1696, 4
      %v1699 = vshll.u32 %v1587, 16
      %v1701 = vrot.slane %v1699, 5
      %v1702 = vor.u32 %v1698, %v1701
      %v1703 = vrot.slane %v1702, 4
      %v1705 = vshll.u32 %v1588, 16
      %v1707 = vrot.slane %v1705, 5
      %v1708 = vsel %vm212, %v1703, %v1707
      %v1709 = vshrl.u32 %v1588, 16
      %v1711 = vrot.slane %v1709, 4
      %v1712 = vor.u32 %v1711, %v1707
      %v1713 = vrot.slane %v1712, 4
      %v1715 = vshll.u32 %v1589, 16
      %v1717 = vrot.slane %v1715, 5
      %v1718 = vsel %vm212, %v1713, %v1717
      %v1720 = vshrl.u32 %v1590, 16
      %v1722 = vrot.slane %v1720, 4
      %v1723 = vshll.u32 %v1590, 16
      %v1725 = vrot.slane %v1723, 5
      %v1726 = vor.u32 %v1722, %v1725
      %v1727 = vrot.slane %v1726, 4
      %v1729 = vshll.u32 %v1591, 16
      %v1731 = vrot.slane %v1729, 5
      %v1732 = vsel %vm212, %v1727, %v1731
      %v1733 = vshrl.u32 %v1591, 16
      %v1735 = vrot.slane %v1733, 4
      %v1736 = vor.u32 %v1735, %v1731
      %v1737 = vrot.slane %v1736, 4
      %v1739 = vshll.u32 %v1592, 16
      %v1741 = vrot.slane %v1739, 5
      %v1742 = vsel %vm212, %v1737, %v1741
      %v1744 = vshrl.u32 %v1593, 16
      %v1746 = vrot.slane %v1744, 4
      %v1747 = vshll.u32 %v1593, 16
      %v1749 = vrot.slane %v1747, 5
      %v1750 = vor.u32 %v1746, %v1749
      %v1751 = vrot.slane %v1750, 4
      %v1753 = vshll.u32 %v1594, 16
      %v1755 = vrot.slane %v1753, 5
      %v1756 = vsel %vm212, %v1751, %v1755
      %v1757 = vshrl.u32 %v1594, 16
      %v1759 = vrot.slane %v1757, 4
      %v1760 = vor.u32 %v1759, %v1755
      %v1761 = vrot.slane %v1760, 4
      %v1763 = vshll.u32 %v1595, 16
      %v1765 = vrot.slane %v1763, 5
      %v1766 = vsel %vm212, %v1761, %v1765
      %v1768 = vshrl.u32 %v1596, 16
      %v1770 = vrot.slane %v1768, 4
      %v1771 = vshll.u32 %v1596, 16
      %v1773 = vrot.slane %v1771, 5
      %v1774 = vor.u32 %v1770, %v1773
      %v1775 = vrot.slane %v1774, 4
      %v1777 = vshll.u32 %v1597, 16
      %v1779 = vrot.slane %v1777, 5
      %v1780 = vsel %vm212, %v1775, %v1779
      %v1781 = vshrl.u32 %v1597, 16
      %v1783 = vrot.slane %v1781, 4
      %v1784 = vor.u32 %v1783, %v1779
      %v1785 = vrot.slane %v1784, 4
      %v1787 = vshll.u32 %v1598, 16
      %v1789 = vrot.slane %v1787, 5
      %v1790 = vsel %vm212, %v1785, %v1789
      %s1791 = scalar_lea.vmem %s1, 28
      %v1792 = vld [vmem:[%s1791] sm:$0xf]
      %v1793 = vunpack.c.l.b16 %v1612
      %v1794 = vunpack.c.l.b16 %v1622
      %v1795 = vunpack.c.l.b16 %v1636
      %v1796 = vunpack.c.l.b16 %v1646
      %v1797 = vunpack.c.l.b16 %v1660
      %v1798 = vunpack.c.l.b16 %v1670
      %v1799 = vunpack.c.l.b16 %v1684
      %v1800 = vunpack.c.l.b16 %v1694
      %v1801 = vunpack.c.l.b16 %v1708
      %v1802 = vunpack.c.l.b16 %v1718
      %v1803 = vunpack.c.l.b16 %v1732
      %v1804 = vunpack.c.l.b16 %v1742
      %v1805 = vunpack.c.l.b16 %v1756
      %v1806 = vunpack.c.l.b16 %v1766
      %v1807 = vunpack.c.l.b16 %v1780
      %v1808 = vunpack.c.l.b16 %v1790
      %v1809 = vpack.c.b16 %v1794, %v1793
      %v1810 = vpack.c.b16 %v1796, %v1795
      %v1811 = vpack.c.b16 %v1798, %v1797
      %v1812 = vpack.c.b16 %v1800, %v1799
      %v1813 = vpack.c.b16 %v1802, %v1801
      %v1814 = vpack.c.b16 %v1804, %v1803
      %v1815 = vpack.c.b16 %v1806, %v1805
      %v1816 = vpack.c.b16 %v1808, %v1807
      %v1818 = vsel %vm431, %v1792, 0
      %v1821 = vsel %vm431, %v1809, 0
      %v1824 = vsel %vm431, %v1810, 0
      %v1827 = vsel %vm431, %v1811, 0
      %v1830 = vsel %vm431, %v1812, 0
      %v1833 = vsel %vm431, %v1813, 0
      %v1836 = vsel %vm431, %v1814, 0
      %v1839 = vsel %vm431, %v1815, 0
      %v1842 = vsel %vm431, %v1816, 0
      %1844 = vmatprep.subr.bf16.mxu0 0
      %1845 = vmatpush1.bf16.xpose.msra.mxu0 %v1821
      %1846 = vmatprep.subr.bf16.mxu0 0
      %1847 = vmatpush1.bf16.xpose.msra.mxu0 %v1824
      %1848 = vmatprep.subr.bf16.mxu0 0
      %1849 = vmatpush1.bf16.xpose.msra.mxu0 %v1827
      %1850 = vmatprep.subr.bf16.mxu0 0
      %1851 = vmatpush1.bf16.xpose.msra.mxu0 %v1830
      %1852 = vmatprep.subr.bf16.mxu0 0
      %1853 = vmatpush1.bf16.xpose.msra.mxu0 %v1833
      %1854 = vmatprep.subr.bf16.mxu0 0
      %1855 = vmatpush1.bf16.xpose.msra.mxu0 %v1836
      %1856 = vmatprep.subr.bf16.mxu0 0
      %1857 = vmatpush1.bf16.xpose.msra.mxu0 %v1839
      %1858 = vmatprep.subr.bf16.mxu0 0
      %1859 = vmatpush1.bf16.xpose.msra.mxu0 %v1842
      %1860 = vmatprep.subr.bf16.mxu0 0
      %1861 = vmatpush1.bf16.xpose.msra.mxu0 0
      %1862 = vmatprep.subr.bf16.mxu0 0
      %1863 = vmatpush1.bf16.xpose.msra.mxu0 0
      %1864 = vmatprep.subr.bf16.mxu0 0
      %1865 = vmatpush1.bf16.xpose.msra.mxu0 0
      %1866 = vmatprep.subr.bf16.mxu0 0
      %1867 = vmatpush1.bf16.xpose.msra.mxu0 0
      %1868 = vmatprep.subr.bf16.mxu0 0
      %1869 = vmatpush1.bf16.xpose.msra.mxu0 0
      %1870 = vmatprep.subr.bf16.mxu0 0
      %1871 = vmatpush1.bf16.xpose.msra.mxu0 0
      %1872 = vmatprep.subr.bf16.mxu0 0
      %1873 = vmatpush1.bf16.xpose.msra.mxu0 0
      %1874 = vmatprep.subr.bf16.mxu0 0
      %1875 = vmatpush1.bf16.xpose.msra.mxu0 0
      %1876 = vmatprep.mubr.bf16.mxu0 0
      %1877 = vmatmul.mubr.bf16.gmra.mrb[0].mxu0 %v1818
      %v1878 = vpop.f32.mrb[0].mxu0
      %v1879 = vadd.f32 0.0, %v1878
      %v1880 = vpop.f32.mrb[0].mxu0
      %v1881 = vpop.f32.mrb[0].mxu0
      %v1882 = vpop.f32.mrb[0].mxu0
      %1883 = vdwg.mxu0
      %v1884 = vadd.f32 %v1574, %v1879
      %v1885 = vld [vmem:[%s1448] sm:$0xe]
      %v1886 = vld [vmem:[%s1448 + $0x4] sm:$0xf]
      %v1887 = vld [vmem:[%s1448 + $0x8] sm:$0x1]
      %v1888 = vld [vmem:[%s1448 + $0xc] sm:$0xe]
      %v1889 = vld [vmem:[%s1448 + $0x10] sm:$0xf]
      %v1890 = vld [vmem:[%s1448 + $0x14] sm:$0x1]
      %v1891 = vld [vmem:[%s1448 + $0x18] sm:$0xe]
      %v1892 = vld [vmem:[%s1448 + $0x1c] sm:$0xf]
      %v1893 = vld [vmem:[%s1448 + $0x20] sm:$0x1]
      %v1894 = vld [vmem:[%s1448 + $0x24] sm:$0xe]
      %v1895 = vld [vmem:[%s1448 + $0x28] sm:$0xf]
      %v1896 = vld [vmem:[%s1448 + $0x2c] sm:$0x1]
      %v1897 = vld [vmem:[%s1448 + $0x30] sm:$0xe]
      %v1898 = vld [vmem:[%s1448 + $0x34] sm:$0xf]
      %v1899 = vld [vmem:[%s1448 + $0x38] sm:$0x1]
      %v1900 = vld [vmem:[%s1448 + $0x3c] sm:$0xe]
      %v1901 = vld [vmem:[%s1448 + $0x40] sm:$0xf]
      %v1902 = vld [vmem:[%s1448 + $0x44] sm:$0x1]
      %v1903 = vld [vmem:[%s1448 + $0x48] sm:$0xe]
      %v1904 = vld [vmem:[%s1448 + $0x4c] sm:$0xf]
      %v1905 = vld [vmem:[%s1448 + $0x50] sm:$0x1]
      %v1906 = vld [vmem:[%s1448 + $0x54] sm:$0xe]
      %v1907 = vld [vmem:[%s1448 + $0x58] sm:$0xf]
      %v1908 = vld [vmem:[%s1448 + $0x5c] sm:$0x1]
      %v1933 = vrot.slane %v1885, 5
      %v1934 = vrot.slane %v1933, 4
      %v1935 = vrot.slane %v1886, 5
      %v1936 = vsel %vm656, %v1934, %v1935
      %v1937 = vrot.slane %v1935, 4
      %v1938 = vrot.slane %v1887, 5
      %v1939 = vsel %vm656, %v1937, %v1938
      %v1940 = vrot.slane %v1888, 5
      %v1941 = vrot.slane %v1940, 4
      %v1942 = vrot.slane %v1889, 5
      %v1943 = vsel %vm656, %v1941, %v1942
      %v1944 = vrot.slane %v1942, 4
      %v1945 = vrot.slane %v1890, 5
      %v1946 = vsel %vm656, %v1944, %v1945
      %v1947 = vrot.slane %v1891, 5
      %v1948 = vrot.slane %v1947, 4
      %v1949 = vrot.slane %v1892, 5
      %v1950 = vsel %vm656, %v1948, %v1949
      %v1951 = vrot.slane %v1949, 4
      %v1952 = vrot.slane %v1893, 5
      %v1953 = vsel %vm656, %v1951, %v1952
      %v1954 = vrot.slane %v1894, 5
      %v1955 = vrot.slane %v1954, 4
      %v1956 = vrot.slane %v1895, 5
      %v1957 = vsel %vm656, %v1955, %v1956
      %v1958 = vrot.slane %v1956, 4
      %v1959 = vrot.slane %v1896, 5
      %v1960 = vsel %vm656, %v1958, %v1959
      %v1961 = vrot.slane %v1897, 5
      %v1962 = vrot.slane %v1961, 4
      %v1963 = vrot.slane %v1898, 5
      %v1964 = vsel %vm656, %v1962, %v1963
      %v1965 = vrot.slane %v1963, 4
      %v1966 = vrot.slane %v1899, 5
      %v1967 = vsel %vm656, %v1965, %v1966
      %v1968 = vrot.slane %v1900, 5
      %v1969 = vrot.slane %v1968, 4
      %v1970 = vrot.slane %v1901, 5
      %v1971 = vsel %vm656, %v1969, %v1970
      %v1972 = vrot.slane %v1970, 4
      %v1973 = vrot.slane %v1902, 5
      %v1974 = vsel %vm656, %v1972, %v1973
      %v1975 = vrot.slane %v1903, 5
      %v1976 = vrot.slane %v1975, 4
      %v1977 = vrot.slane %v1904, 5
      %v1978 = vsel %vm656, %v1976, %v1977
      %v1979 = vrot.slane %v1977, 4
      %v1980 = vrot.slane %v1905, 5
      %v1981 = vsel %vm656, %v1979, %v1980
      %v1982 = vrot.slane %v1906, 5
      %v1983 = vrot.slane %v1982, 4
      %v1984 = vrot.slane %v1907, 5
      %v1985 = vsel %vm656, %v1983, %v1984
      %v1986 = vrot.slane %v1984, 4
      %v1987 = vrot.slane %v1908, 5
      %v1988 = vsel %vm656, %v1986, %v1987
      %s1989 = scalar_lea.vmem %s1, 32
      %v1990 = vld [vmem:[%s1989] sm:$0xf]
      %v1991 = vunpack.c.l.b16 %v1936
      %v1992 = vunpack.c.l.b16 %v1939
      %v1993 = vunpack.c.l.b16 %v1943
      %v1994 = vunpack.c.l.b16 %v1946
      %v1995 = vunpack.c.l.b16 %v1950
      %v1996 = vunpack.c.l.b16 %v1953
      %v1997 = vunpack.c.l.b16 %v1957
      %v1998 = vunpack.c.l.b16 %v1960
      %v1999 = vunpack.c.l.b16 %v1964
      %v2000 = vunpack.c.l.b16 %v1967
      %v2001 = vunpack.c.l.b16 %v1971
      %v2002 = vunpack.c.l.b16 %v1974
      %v2003 = vunpack.c.l.b16 %v1978
      %v2004 = vunpack.c.l.b16 %v1981
      %v2005 = vunpack.c.l.b16 %v1985
      %v2006 = vunpack.c.l.b16 %v1988
      %v2007 = vpack.c.b16 %v1992, %v1991
      %v2008 = vpack.c.b16 %v1994, %v1993
      %v2009 = vpack.c.b16 %v1996, %v1995
      %v2010 = vpack.c.b16 %v1998, %v1997
      %v2011 = vpack.c.b16 %v2000, %v1999
      %v2012 = vpack.c.b16 %v2002, %v2001
      %v2013 = vpack.c.b16 %v2004, %v2003
      %v2014 = vpack.c.b16 %v2006, %v2005
      %v2016 = vsel %vm431, %v1990, 0
      %v2019 = vsel %vm431, %v2007, 0
      %v2022 = vsel %vm431, %v2008, 0
      %v2025 = vsel %vm431, %v2009, 0
      %v2028 = vsel %vm431, %v2010, 0
      %v2031 = vsel %vm431, %v2011, 0
      %v2034 = vsel %vm431, %v2012, 0
      %v2037 = vsel %vm431, %v2013, 0
      %v2040 = vsel %vm431, %v2014, 0
      %2042 = vmatprep.subr.bf16.mxu0 0
      %2043 = vmatpush1.bf16.xpose.msra.mxu0 %v2019
      %2044 = vmatprep.subr.bf16.mxu0 0
      %2045 = vmatpush1.bf16.xpose.msra.mxu0 %v2022
      %2046 = vmatprep.subr.bf16.mxu0 0
      %2047 = vmatpush1.bf16.xpose.msra.mxu0 %v2025
      %2048 = vmatprep.subr.bf16.mxu0 0
      %2049 = vmatpush1.bf16.xpose.msra.mxu0 %v2028
      %2050 = vmatprep.subr.bf16.mxu0 0
      %2051 = vmatpush1.bf16.xpose.msra.mxu0 %v2031
      %2052 = vmatprep.subr.bf16.mxu0 0
      %2053 = vmatpush1.bf16.xpose.msra.mxu0 %v2034
      %2054 = vmatprep.subr.bf16.mxu0 0
      %2055 = vmatpush1.bf16.xpose.msra.mxu0 %v2037
      %2056 = vmatprep.subr.bf16.mxu0 0
      %2057 = vmatpush1.bf16.xpose.msra.mxu0 %v2040
      %2058 = vmatprep.subr.bf16.mxu0 0
      %2059 = vmatpush1.bf16.xpose.msra.mxu0 0
      %2060 = vmatprep.subr.bf16.mxu0 0
      %2061 = vmatpush1.bf16.xpose.msra.mxu0 0
      %2062 = vmatprep.subr.bf16.mxu0 0
      %2063 = vmatpush1.bf16.xpose.msra.mxu0 0
      %2064 = vmatprep.subr.bf16.mxu0 0
      %2065 = vmatpush1.bf16.xpose.msra.mxu0 0
      %2066 = vmatprep.subr.bf16.mxu0 0
      %2067 = vmatpush1.bf16.xpose.msra.mxu0 0
      %2068 = vmatprep.subr.bf16.mxu0 0
      %2069 = vmatpush1.bf16.xpose.msra.mxu0 0
      %2070 = vmatprep.subr.bf16.mxu0 0
      %2071 = vmatpush1.bf16.xpose.msra.mxu0 0
      %2072 = vmatprep.subr.bf16.mxu0 0
      %2073 = vmatpush1.bf16.xpose.msra.mxu0 0
      %2074 = vmatprep.mubr.bf16.mxu0 0
      %2075 = vmatmul.mubr.bf16.gmra.mrb[0].mxu0 %v2016
      %v2076 = vpop.f32.mrb[0].mxu0
      %v2077 = vadd.f32 0.0, %v2076
      %v2078 = vpop.f32.mrb[0].mxu0
      %v2079 = vpop.f32.mrb[0].mxu0
      %v2080 = vpop.f32.mrb[0].mxu0
      %2081 = vdwg.mxu0
      %v2082 = vadd.f32 %v1884, %v2077
      %2083 = vst [vmem:[%s163] sm:$0xff] %v2082
      %p2084 = scmp.lt.s32.totalorder %s17, 1
      %s2085 = scalar_select %p2084, %s17, 1
      %p2086 = scmp.lt.s32.totalorder %s18, 1
      %s2087 = scalar_select %p2086, %s18, 1
      %s2088 = smul.addr %s2085, 2
      %s2089 = sadd.s32 %s2087, %s2088
      %s2090 = smul.addr %s2089, 8
      %s2091 = scalar_lea.vmem %s2, %s2090
      // Predicated region
      $region29: #{svdconv_forward.1} parent=27 // pred_check
        %p2092 = pneg %p92
      $region30: #{svdconv_forward.1} parent=27 // pred_check_branch
        %2094 = sbr.rel (%p2092) target = $region32
      $region31: #{svdconv_forward.1} parent=27 // pred_region
        _
      $region32: #{svdconv_forward.1} parent=27 // pred_fallthru
        _
    $region28: #{svdconv_forward.1} parent=5 // pred_fallthru
      _
    %p2095 = scmp.le.s32.totalorder 2, %s8
    // Predicated region
    $region33: #{svdconv_forward.1} parent=5 // pred_check
      %p2096 = pneg %p2095
    $region34: #{svdconv_forward.1} parent=5 // pred_check_branch
      %2098 = sbr.rel (%p2096) target = $region36
    $region35: #{svdconv_forward.1} parent=5 // pred_region
      %s2099 = ssub.s32 %s8, 2
      // Predicated region
      $region37: #{svdconv_forward.1} parent=35 // pred_check
        %p2100 = pneg %p98
      $region38: #{svdconv_forward.1} parent=35 // pred_check_branch
        %2102 = sbr.rel (%p2100) target = $region40
      $region39: #{svdconv_forward.1} parent=35 // pred_region
        %p2103 = scmp.lt.s32.totalorder %s19, 1
        %s2104 = scalar_select %p2103, %s19, 1
        %p2105 = scmp.lt.s32.totalorder %s20, 1
        %s2106 = scalar_select %p2105, %s20, 1
        %s2107 = smul.addr %s2104, 2
        %s2108 = sadd.s32 %s2106, %s2107
        %s2109 = smul.addr %s2108, 8
        %s2110 = scalar_lea.vmem %s2, %s2109
      $region40: #{svdconv_forward.1} parent=35 // pred_fallthru
        _
    $region36: #{svdconv_forward.1} parent=5 // pred_fallthru
      _
  $region6: #{svdconv_forward.1} parent=0 // loop_footer
    %s12 = sadd.s32 1, %s8
  $region7: #{svdconv_forward.1} parent=0 // loop_footer_branch
    %7 = sbr.rel target = $region3
  $region8: #{svdconv_forward.1} parent=0 // loop_exit
    _

</llo_original>
